<compile_context>
chip_gen: v5e
topology: v5e:2x2
jax: 0.10.0
libtpu: 0.0.40
codegen_flags: <defaults>
</compile_context>

<pallas_src>
import functools

import jax
import jax.numpy as jnp
from jax import lax
from jax.experimental import pallas as pl
from jax.experimental.pallas import tpu as pltpu


# ----------------------- fused FeedForward kernel (one batch element) -----------------------
def _ff_fused_kernel(x_ref, w_in3_ref, w_in5_ref, w3_ref, w5_ref, mask_ref,
                     w_out3_ref, w_out5_ref, w_eca_ref, o_ref, *, H, W):
    HW = H * W
    C = o_ref.shape[1]

    x = x_ref[0]                                                       # (C, HW) bf16

    # ---- project_in (1x1 conv), split into the two depthwise halves: MXU, f32 accum ----
    y3 = jnp.dot(w_in3_ref[...], x, preferred_element_type=jnp.float32)   # (hid, HW) f32
    y5 = jnp.dot(w_in5_ref[...], x, preferred_element_type=jnp.float32)   # (hid, HW) f32

    # ---- depthwise conv + ReLU.  Pixels are on the lane axis, so each spatial tap is a
    # lane roll (XLU slot) of the flattened image, a precomputed boundary-mask multiply
    # and a per-channel weight multiply (both VPU, f32).
    def dwconv_relu(y, w_ref, K):
        P = K // 2
        ctr = P * K + P
        acc = y * w_ref[:, ctr:ctr + 1]                                # centre tap: no roll/mask
        for dy in range(K):
            for dx in range(K):
                if dy == P and dx == P:
                    continue
                s_h, s_w = dy - P, dx - P
                # shifted[p] = y[p + s_h*W + s_w]  for flattened p = h*W + w
                shift = (-(s_h * W + s_w)) % HW
                rolled = pltpu.roll(y, shift, axis=1)
                m = (s_h + 2) * 5 + (s_w + 2)                          # row in the 5x5 mask table
                t = dy * K + dx
                acc = acc + (rolled * mask_ref[m:m + 1, :]) * w_ref[:, t:t + 1]
        return jnp.maximum(acc, 0.0)

    r3 = dwconv_relu(y3, w3_ref, 3)                                    # (hid, HW) f32
    r5 = dwconv_relu(y5, w5_ref, 5)                                    # (hid, HW) f32

    # ---- project_out (1x1 conv): two MXU dots summed (avoids a concat) ----
    out = (jnp.dot(w_out3_ref[...], r3.astype(jnp.bfloat16),
                   preferred_element_type=jnp.float32)
           + jnp.dot(w_out5_ref[...], r5.astype(jnp.bfloat16),
                     preferred_element_type=jnp.float32))              # (C, HW) f32

    # ---- GSLC / eca: global avg pool -> conv1d(k=3, pad=1, no bias) over C -> sigmoid ----
    pooled = jnp.mean(out, axis=1, keepdims=True)                      # (C, 1)
    cidx = lax.broadcasted_iota(jnp.int32, (C, 1), 0)
    pm1 = jnp.where(cidx >= 1, pltpu.roll(pooled, 1, axis=0), 0.0)     # pooled[c-1], 0 at c=0
    pp1 = jnp.where(cidx <= C - 2, pltpu.roll(pooled, C - 1, axis=0), 0.0)  # pooled[c+1], 0 at end
    s = w_eca_ref[0] * pm1 + w_eca_ref[1] * pooled + w_eca_ref[2] * pp1
    scale = 1.0 / (1.0 + jnp.exp(-s))                                  # sigmoid, (C, 1)
    o_ref[0] = (out * scale).astype(o_ref.dtype)


# ------------------------------ wrapper / glue ------------------------------
def init_params(key, dim, ffn_expansion_factor):
    """Parameters in PyTorch-like shapes (bias=False for all convs)."""
    hid = int(dim * ffn_expansion_factor)
    k1, k2, k3, k4, k5 = jax.random.split(key, 5)
    w_in = jax.random.normal(k1, (2 * hid, dim), jnp.float32) / jnp.sqrt(dim)   # Conv2d 1x1
    w3 = jax.random.normal(k2, (hid, 3, 3), jnp.float32) / 3.0                  # depthwise 3x3
    w5 = jax.random.normal(k3, (hid, 5, 5), jnp.float32) / 5.0                  # depthwise 5x5
    w_out = jax.random.normal(k4, (dim, 2 * hid), jnp.float32) / jnp.sqrt(2 * hid)
    w_eca = jax.random.normal(k5, (3,), jnp.float32) / jnp.sqrt(3.0)            # Conv1d k=3
    return w_in, w3, w5, w_out, w_eca


def feed_forward(x_nchw, params):
    w_in, w3, w5, w_out, w_eca = params
    B, C, H, W = x_nchw.shape
    hid = w3.shape[0]
    HW = H * W

    # NCHW -> (B, C, HW): pure reshape, channels on sublanes, pixels on lanes.
    # bf16 activations halve the input DMA (accumulation is f32 in-kernel).
    x = x_nchw.reshape(B, C, HW).astype(jnp.bfloat16)

    # MXU weight operands (bf16), split per depthwise half.
    w_in3 = w_in[:hid].astype(jnp.bfloat16)        # (hid, C)
    w_in5 = w_in[hid:].astype(jnp.bfloat16)        # (hid, C)
    w_out3 = w_out[:, :hid].astype(jnp.bfloat16)   # (C, hid)
    w_out5 = w_out[:, hid:].astype(jnp.bfloat16)   # (C, hid)

    # Depthwise weights as (hid, K*K) f32: column t = dy*K + dx (channels on sublanes).
    w3t = w3.reshape(hid, 9)
    w5t = w5.reshape(hid, 25)

    # Boundary masks for every 5x5 spatial offset, built once (row m = (s_h+2)*5 + (s_w+2)).
    hh = jnp.arange(HW, dtype=jnp.int32) // W
    ww = jnp.arange(HW, dtype=jnp.int32) % W
    rows = []
    for dy in range(5):
        for dx in range(5):
            s_h, s_w = dy - 2, dx - 2
            valid = ((hh + s_h >= 0) & (hh + s_h < H)
                     & (ww + s_w >= 0) & (ww + s_w < W))
            rows.append(valid.astype(jnp.float32))
    masks = jnp.stack(rows, axis=0)                # (25, HW)

    w_eca_f32 = w_eca.astype(jnp.float32)          # (3,) -> SMEM scalars

    flops = int(B * (2 * HW * C * 2 * hid          # project_in
                     + 2 * HW * hid * (9 + 25)     # depthwise MACs
                     + 2 * HW * 2 * hid * C))      # project_out
    bytes_accessed = int(x.size * 2 + B * C * HW * 4
                         + (w_in3.size + w_in5.size + w_out3.size + w_out5.size) * 2
                         + (w3t.size + w5t.size + masks.size + w_eca_f32.size) * 4)
    ce = pl.CostEstimate(flops=flops, transcendentals=int(B * C),
                         bytes_accessed=bytes_accessed)

    out = pl.pallas_call(
        functools.partial(_ff_fused_kernel, H=H, W=W),
        out_shape=jax.ShapeDtypeStruct((B, C, HW), jnp.float32),
        grid=(B,),
        in_specs=[
            pl.BlockSpec((1, C, HW), lambda b: (b, 0, 0)),   # activations (bf16)
            pl.BlockSpec((hid, C), lambda b: (0, 0)),        # w_in, 3x3 half (bf16)
            pl.BlockSpec((hid, C), lambda b: (0, 0)),        # w_in, 5x5 half (bf16)
            pl.BlockSpec((hid, 9), lambda b: (0, 0)),        # dw 3x3 weights (f32)
            pl.BlockSpec((hid, 25), lambda b: (0, 0)),       # dw 5x5 weights (f32)
            pl.BlockSpec((25, HW), lambda b: (0, 0)),        # boundary mask table (f32)
            pl.BlockSpec((C, hid), lambda b: (0, 0)),        # w_out, 3x3 half (bf16)
            pl.BlockSpec((C, hid), lambda b: (0, 0)),        # w_out, 5x5 half (bf16)
            pl.BlockSpec(memory_space=pltpu.MemorySpace.SMEM),  # eca weights (3,) f32
        ],
        out_specs=pl.BlockSpec((1, C, HW), lambda b: (b, 0, 0)),
        compiler_params=pltpu.CompilerParams(
            dimension_semantics=("parallel",)),
        cost_estimate=ce,
    )(x, w_in3, w_in5, w3t, w5t, masks, w_out3, w_out5, w_eca_f32)

    return out.reshape(B, C, H, W)                 # already NCHW -- no transpose


# --------------------------- pure-JAX reference ---------------------------
# Mirrors the kernel's numerics (bf16 MXU operands, f32 accumulation for the two
# 1x1 convs; everything else f32) so the comparison tightly checks the structure.
def feed_forward_ref(x_nchw, params):
    w_in, w3, w5, w_out, w_eca = params
    B, C, H, W = x_nchw.shape
    hid = w3.shape[0]
    hp = lax.Precision.HIGHEST
    x = jnp.transpose(x_nchw, (0, 2, 3, 1))        # NHWC

    y = jnp.einsum('bhwc,fc->bhwf', x.astype(jnp.bfloat16),
                   w_in.astype(jnp.bfloat16), preferred_element_type=jnp.float32)

    def dw(v, w, k):
        wk = jnp.transpose(w, (1, 2, 0)).reshape(k, k, 1, hid)   # HWIO, per-group
        return lax.conv_general_dilated(
            v, wk, (1, 1), 'SAME',
            dimension_numbers=('NHWC', 'HWIO', 'NHWC'),
            feature_group_count=hid, precision=hp)

    r3 = jax.nn.relu(dw(y[..., :hid], w3, 3))
    r5 = jax.nn.relu(dw(y[..., hid:], w5, 5))
    cat = jnp.concatenate([r3, r5], axis=-1)
    out = jnp.einsum('bhwf,cf->bhwc', cat.astype(jnp.bfloat16),
                     w_out.astype(jnp.bfloat16), preferred_element_type=jnp.float32)

    pooled = out.mean(axis=(1, 2))                 # (B, C)
    p = jnp.pad(pooled, ((0, 0), (1, 1)))
    s = (w_eca[0] * p[:, 0:C] + w_eca[1] * p[:, 1:C + 1] + w_eca[2] * p[:, 2:C + 2])
    scale = jax.nn.sigmoid(s)[:, None, None, :]
    out = out * scale
    return jnp.transpose(out, (0, 3, 1, 2))


if __name__ == "__main__":
    dim, factor = 8, 2
    B, H, W = 2, 16, 16
    key = jax.random.PRNGKey(0)
    kx, kp = jax.random.split(key)
    x = jax.random.normal(kx, (B, dim, H, W), jnp.float32)   # NCHW, like PyTorch
    params = init_params(kp, dim, factor)

    ff = jax.jit(feed_forward)
    out = jax.block_until_ready(ff(x, params))

    ref = feed_forward_ref(x, params)
    assert out.shape == x.shape
    max_diff = float(jnp.max(jnp.abs(out - ref)))
    assert bool(jnp.allclose(out, ref, atol=2e-2, rtol=2e-2)), \
        f"max abs diff = {max_diff}"
    print("KERNEL_OK")
</pallas_src>

<mosaic_0001>
module attributes {stable_mosaic.version = 11 : i64} {
  func.func @_ff_fused_kernel(%arg0: i32, %arg1: memref<1x8x256xbf16, #tpu.memory_space<vmem>>, %arg2: memref<16x8xbf16, #tpu.memory_space<vmem>>, %arg3: memref<16x8xbf16, #tpu.memory_space<vmem>>, %arg4: memref<16x9xf32, #tpu.memory_space<vmem>>, %arg5: memref<16x25xf32, #tpu.memory_space<vmem>>, %arg6: memref<25x256xf32, #tpu.memory_space<vmem>>, %arg7: memref<8x16xbf16, #tpu.memory_space<vmem>>, %arg8: memref<8x16xbf16, #tpu.memory_space<vmem>>, %arg9: memref<3xf32, #tpu.memory_space<smem>>, %arg10: memref<1x8x256xf32, #tpu.memory_space<vmem>>) attributes {dimension_semantics = [#tpu.dimension_semantics<parallel>], iteration_bounds = array<i64: 2>, scalar_prefetch = 0 : i64, scratch_operands = 0 : i64, tpu.core_type = #tpu.core_type<tc>, window_params = [{transform_indices = @transform_0, window_bounds = array<i64: 1, 8, 256>}, {pipeline_mode = #tpu.pipeline_mode<synchronous>, transform_indices = @transform_1, window_bounds = array<i64: 16, 8>}, {pipeline_mode = #tpu.pipeline_mode<synchronous>, transform_indices = @transform_2, window_bounds = array<i64: 16, 8>}, {pipeline_mode = #tpu.pipeline_mode<synchronous>, transform_indices = @transform_3, window_bounds = array<i64: 16, 9>}, {pipeline_mode = #tpu.pipeline_mode<synchronous>, transform_indices = @transform_4, window_bounds = array<i64: 16, 25>}, {pipeline_mode = #tpu.pipeline_mode<synchronous>, transform_indices = @transform_5, window_bounds = array<i64: 25, 256>}, {pipeline_mode = #tpu.pipeline_mode<synchronous>, transform_indices = @transform_6, window_bounds = array<i64: 8, 16>}, {pipeline_mode = #tpu.pipeline_mode<synchronous>, transform_indices = @transform_7, window_bounds = array<i64: 8, 16>}, {transform_indices = @transform_8, window_bounds = array<i64: 3>}, {transform_indices = @transform_9, window_bounds = array<i64: 1, 8, 256>}]} {
    %c0 = arith.constant 0 : index
    %c0_0 = arith.constant 0 : index
    %c0_1 = arith.constant 0 : index
    %0 = vector.load %arg1[%c0, %c0_0, %c0_1] : memref<1x8x256xbf16, #tpu.memory_space<vmem>>, vector<1x8x256xbf16>
    %1 = vector.shape_cast %0 : vector<1x8x256xbf16> to vector<8x256xbf16>
    %c0_2 = arith.constant 0 : index
    %c0_3 = arith.constant 0 : index
    %2 = vector.load %arg2[%c0_2, %c0_3] : memref<16x8xbf16, #tpu.memory_space<vmem>>, vector<16x8xbf16>
    %cst = arith.constant dense<0.000000e+00> : vector<16x256xf32>
    %3 = tpu.matmul %2, %1, %cst {dimension_numbers = #tpu.dot_dimension_numbers<[1], [0], [0], [1], [0, 0, 1, 1], [], []>} : vector<16x8xbf16>, vector<8x256xbf16>, vector<16x256xf32> -> vector<16x256xf32>
    %c0_4 = arith.constant 0 : index
    %c0_5 = arith.constant 0 : index
    %4 = vector.load %arg3[%c0_4, %c0_5] : memref<16x8xbf16, #tpu.memory_space<vmem>>, vector<16x8xbf16>
    %cst_6 = arith.constant dense<0.000000e+00> : vector<16x256xf32>
    %5 = tpu.matmul %4, %1, %cst_6 {dimension_numbers = #tpu.dot_dimension_numbers<[1], [0], [0], [1], [0, 0, 1, 1], [], []>} : vector<16x8xbf16>, vector<8x256xbf16>, vector<16x256xf32> -> vector<16x256xf32>
    %c0_7 = arith.constant 0 : index
    %c4 = arith.constant 4 : index
    %6 = vector.load %arg4[%c0_7, %c4] : memref<16x9xf32, #tpu.memory_space<vmem>>, vector<16x1xf32>
    %7 = vector.broadcast %6 : vector<16x1xf32> to vector<16x256xf32>
    %8 = arith.mulf %3, %7 : vector<16x256xf32>
    %c17_i32 = arith.constant 17 : i32
    %9 = tpu.dynamic_rotate %3 by %c17_i32 dim 1 : vector<16x256xf32>, i32 -> vector<16x256xf32>
    %c6 = arith.constant 6 : index
    %c0_8 = arith.constant 0 : index
    %10 = vector.load %arg6[%c6, %c0_8] : memref<25x256xf32, #tpu.memory_space<vmem>>, vector<1x256xf32>
    %11 = vector.broadcast %10 : vector<1x256xf32> to vector<16x256xf32>
    %12 = arith.mulf %9, %11 : vector<16x256xf32>
    %c0_9 = arith.constant 0 : index
    %c0_10 = arith.constant 0 : index
    %13 = vector.load %arg4[%c0_9, %c0_10] : memref<16x9xf32, #tpu.memory_space<vmem>>, vector<16x1xf32>
    %14 = vector.broadcast %13 : vector<16x1xf32> to vector<16x256xf32>
    %15 = arith.mulf %12, %14 : vector<16x256xf32>
    %16 = arith.addf %8, %15 : vector<16x256xf32>
    %c16_i32 = arith.constant 16 : i32
    %17 = tpu.dynamic_rotate %3 by %c16_i32 dim 1 : vector<16x256xf32>, i32 -> vector<16x256xf32>
    %c7 = arith.constant 7 : index
    %c0_11 = arith.constant 0 : index
    %18 = vector.load %arg6[%c7, %c0_11] : memref<25x256xf32, #tpu.memory_space<vmem>>, vector<1x256xf32>
    %19 = vector.broadcast %18 : vector<1x256xf32> to vector<16x256xf32>
    %20 = arith.mulf %17, %19 : vector<16x256xf32>
    %c0_12 = arith.constant 0 : index
    %c1 = arith.constant 1 : index
    %21 = vector.load %arg4[%c0_12, %c1] : memref<16x9xf32, #tpu.memory_space<vmem>>, vector<16x1xf32>
    %22 = vector.broadcast %21 : vector<16x1xf32> to vector<16x256xf32>
    %23 = arith.mulf %20, %22 : vector<16x256xf32>
    %24 = arith.addf %16, %23 : vector<16x256xf32>
    %c15_i32 = arith.constant 15 : i32
    %25 = tpu.dynamic_rotate %3 by %c15_i32 dim 1 : vector<16x256xf32>, i32 -> vector<16x256xf32>
    %c8 = arith.constant 8 : index
    %c0_13 = arith.constant 0 : index
    %26 = vector.load %arg6[%c8, %c0_13] : memref<25x256xf32, #tpu.memory_space<vmem>>, vector<1x256xf32>
    %27 = vector.broadcast %26 : vector<1x256xf32> to vector<16x256xf32>
    %28 = arith.mulf %25, %27 : vector<16x256xf32>
    %c0_14 = arith.constant 0 : index
    %c2 = arith.constant 2 : index
    %29 = vector.load %arg4[%c0_14, %c2] : memref<16x9xf32, #tpu.memory_space<vmem>>, vector<16x1xf32>
    %30 = vector.broadcast %29 : vector<16x1xf32> to vector<16x256xf32>
    %31 = arith.mulf %28, %30 : vector<16x256xf32>
    %32 = arith.addf %24, %31 : vector<16x256xf32>
    %c1_i32 = arith.constant 1 : i32
    %33 = tpu.dynamic_rotate %3 by %c1_i32 dim 1 : vector<16x256xf32>, i32 -> vector<16x256xf32>
    %c11 = arith.constant 11 : index
    %c0_15 = arith.constant 0 : index
    %34 = vector.load %arg6[%c11, %c0_15] : memref<25x256xf32, #tpu.memory_space<vmem>>, vector<1x256xf32>
    %35 = vector.broadcast %34 : vector<1x256xf32> to vector<16x256xf32>
    %36 = arith.mulf %33, %35 : vector<16x256xf32>
    %c0_16 = arith.constant 0 : index
    %c3 = arith.constant 3 : index
    %37 = vector.load %arg4[%c0_16, %c3] : memref<16x9xf32, #tpu.memory_space<vmem>>, vector<16x1xf32>
    %38 = vector.broadcast %37 : vector<16x1xf32> to vector<16x256xf32>
    %39 = arith.mulf %36, %38 : vector<16x256xf32>
    %40 = arith.addf %32, %39 : vector<16x256xf32>
    %c255_i32 = arith.constant 255 : i32
    %41 = tpu.dynamic_rotate %3 by %c255_i32 dim 1 : vector<16x256xf32>, i32 -> vector<16x256xf32>
    %c13 = arith.constant 13 : index
    %c0_17 = arith.constant 0 : index
    %42 = vector.load %arg6[%c13, %c0_17] : memref<25x256xf32, #tpu.memory_space<vmem>>, vector<1x256xf32>
    %43 = vector.broadcast %42 : vector<1x256xf32> to vector<16x256xf32>
    %44 = arith.mulf %41, %43 : vector<16x256xf32>
    %c0_18 = arith.constant 0 : index
    %c5 = arith.constant 5 : index
    %45 = vector.load %arg4[%c0_18, %c5] : memref<16x9xf32, #tpu.memory_space<vmem>>, vector<16x1xf32>
    %46 = vector.broadcast %45 : vector<16x1xf32> to vector<16x256xf32>
    %47 = arith.mulf %44, %46 : vector<16x256xf32>
    %48 = arith.addf %40, %47 : vector<16x256xf32>
    %c241_i32 = arith.constant 241 : i32
    %49 = tpu.dynamic_rotate %3 by %c241_i32 dim 1 : vector<16x256xf32>, i32 -> vector<16x256xf32>
    %c16 = arith.constant 16 : index
    %c0_19 = arith.constant 0 : index
    %50 = vector.load %arg6[%c16, %c0_19] : memref<25x256xf32, #tpu.memory_space<vmem>>, vector<1x256xf32>
    %51 = vector.broadcast %50 : vector<1x256xf32> to vector<16x256xf32>
    %52 = arith.mulf %49, %51 : vector<16x256xf32>
    %c0_20 = arith.constant 0 : index
    %c6_21 = arith.constant 6 : index
    %53 = vector.load %arg4[%c0_20, %c6_21] : memref<16x9xf32, #tpu.memory_space<vmem>>, vector<16x1xf32>
    %54 = vector.broadcast %53 : vector<16x1xf32> to vector<16x256xf32>
    %55 = arith.mulf %52, %54 : vector<16x256xf32>
    %56 = arith.addf %48, %55 : vector<16x256xf32>
    %c240_i32 = arith.constant 240 : i32
    %57 = tpu.dynamic_rotate %3 by %c240_i32 dim 1 : vector<16x256xf32>, i32 -> vector<16x256xf32>
    %c17 = arith.constant 17 : index
    %c0_22 = arith.constant 0 : index
    %58 = vector.load %arg6[%c17, %c0_22] : memref<25x256xf32, #tpu.memory_space<vmem>>, vector<1x256xf32>
    %59 = vector.broadcast %58 : vector<1x256xf32> to vector<16x256xf32>
    %60 = arith.mulf %57, %59 : vector<16x256xf32>
    %c0_23 = arith.constant 0 : index
    %c7_24 = arith.constant 7 : index
    %61 = vector.load %arg4[%c0_23, %c7_24] : memref<16x9xf32, #tpu.memory_space<vmem>>, vector<16x1xf32>
    %62 = vector.broadcast %61 : vector<16x1xf32> to vector<16x256xf32>
    %63 = arith.mulf %60, %62 : vector<16x256xf32>
    %64 = arith.addf %56, %63 : vector<16x256xf32>
    %c239_i32 = arith.constant 239 : i32
    %65 = tpu.dynamic_rotate %3 by %c239_i32 dim 1 : vector<16x256xf32>, i32 -> vector<16x256xf32>
    %c18 = arith.constant 18 : index
    %c0_25 = arith.constant 0 : index
    %66 = vector.load %arg6[%c18, %c0_25] : memref<25x256xf32, #tpu.memory_space<vmem>>, vector<1x256xf32>
    %67 = vector.broadcast %66 : vector<1x256xf32> to vector<16x256xf32>
    %68 = arith.mulf %65, %67 : vector<16x256xf32>
    %c0_26 = arith.constant 0 : index
    %c8_27 = arith.constant 8 : index
    %69 = vector.load %arg4[%c0_26, %c8_27] : memref<16x9xf32, #tpu.memory_space<vmem>>, vector<16x1xf32>
    %70 = vector.broadcast %69 : vector<16x1xf32> to vector<16x256xf32>
    %71 = arith.mulf %68, %70 : vector<16x256xf32>
    %72 = arith.addf %64, %71 : vector<16x256xf32>
    %cst_28 = arith.constant 0.000000e+00 : f32
    %73 = vector.broadcast %cst_28 : f32 to vector<16x256xf32>
    %74 = arith.maximumf %72, %73 : vector<16x256xf32>
    %c0_29 = arith.constant 0 : index
    %c12 = arith.constant 12 : index
    %75 = vector.load %arg5[%c0_29, %c12] : memref<16x25xf32, #tpu.memory_space<vmem>>, vector<16x1xf32>
    %76 = vector.broadcast %75 : vector<16x1xf32> to vector<16x256xf32>
    %77 = arith.mulf %5, %76 : vector<16x256xf32>
    %c34_i32 = arith.constant 34 : i32
    %78 = tpu.dynamic_rotate %5 by %c34_i32 dim 1 : vector<16x256xf32>, i32 -> vector<16x256xf32>
    %c0_30 = arith.constant 0 : index
    %c0_31 = arith.constant 0 : index
    %79 = vector.load %arg6[%c0_30, %c0_31] : memref<25x256xf32, #tpu.memory_space<vmem>>, vector<1x256xf32>
    %80 = vector.broadcast %79 : vector<1x256xf32> to vector<16x256xf32>
    %81 = arith.mulf %78, %80 : vector<16x256xf32>
    %c0_32 = arith.constant 0 : index
    %c0_33 = arith.constant 0 : index
    %82 = vector.load %arg5[%c0_32, %c0_33] : memref<16x25xf32, #tpu.memory_space<vmem>>, vector<16x1xf32>
    %83 = vector.broadcast %82 : vector<16x1xf32> to vector<16x256xf32>
    %84 = arith.mulf %81, %83 : vector<16x256xf32>
    %85 = arith.addf %77, %84 : vector<16x256xf32>
    %c33_i32 = arith.constant 33 : i32
    %86 = tpu.dynamic_rotate %5 by %c33_i32 dim 1 : vector<16x256xf32>, i32 -> vector<16x256xf32>
    %c1_34 = arith.constant 1 : index
    %c0_35 = arith.constant 0 : index
    %87 = vector.load %arg6[%c1_34, %c0_35] : memref<25x256xf32, #tpu.memory_space<vmem>>, vector<1x256xf32>
    %88 = vector.broadcast %87 : vector<1x256xf32> to vector<16x256xf32>
    %89 = arith.mulf %86, %88 : vector<16x256xf32>
    %c0_36 = arith.constant 0 : index
    %c1_37 = arith.constant 1 : index
    %90 = vector.load %arg5[%c0_36, %c1_37] : memref<16x25xf32, #tpu.memory_space<vmem>>, vector<16x1xf32>
    %91 = vector.broadcast %90 : vector<16x1xf32> to vector<16x256xf32>
    %92 = arith.mulf %89, %91 : vector<16x256xf32>
    %93 = arith.addf %85, %92 : vector<16x256xf32>
    %c32_i32 = arith.constant 32 : i32
    %94 = tpu.dynamic_rotate %5 by %c32_i32 dim 1 : vector<16x256xf32>, i32 -> vector<16x256xf32>
    %c2_38 = arith.constant 2 : index
    %c0_39 = arith.constant 0 : index
    %95 = vector.load %arg6[%c2_38, %c0_39] : memref<25x256xf32, #tpu.memory_space<vmem>>, vector<1x256xf32>
    %96 = vector.broadcast %95 : vector<1x256xf32> to vector<16x256xf32>
    %97 = arith.mulf %94, %96 : vector<16x256xf32>
    %c0_40 = arith.constant 0 : index
    %c2_41 = arith.constant 2 : index
    %98 = vector.load %arg5[%c0_40, %c2_41] : memref<16x25xf32, #tpu.memory_space<vmem>>, vector<16x1xf32>
    %99 = vector.broadcast %98 : vector<16x1xf32> to vector<16x256xf32>
    %100 = arith.mulf %97, %99 : vector<16x256xf32>
    %101 = arith.addf %93, %100 : vector<16x256xf32>
    %c31_i32 = arith.constant 31 : i32
    %102 = tpu.dynamic_rotate %5 by %c31_i32 dim 1 : vector<16x256xf32>, i32 -> vector<16x256xf32>
    %c3_42 = arith.constant 3 : index
    %c0_43 = arith.constant 0 : index
    %103 = vector.load %arg6[%c3_42, %c0_43] : memref<25x256xf32, #tpu.memory_space<vmem>>, vector<1x256xf32>
    %104 = vector.broadcast %103 : vector<1x256xf32> to vector<16x256xf32>
    %105 = arith.mulf %102, %104 : vector<16x256xf32>
    %c0_44 = arith.constant 0 : index
    %c3_45 = arith.constant 3 : index
    %106 = vector.load %arg5[%c0_44, %c3_45] : memref<16x25xf32, #tpu.memory_space<vmem>>, vector<16x1xf32>
    %107 = vector.broadcast %106 : vector<16x1xf32> to vector<16x256xf32>
    %108 = arith.mulf %105, %107 : vector<16x256xf32>
    %109 = arith.addf %101, %108 : vector<16x256xf32>
    %c30_i32 = arith.constant 30 : i32
    %110 = tpu.dynamic_rotate %5 by %c30_i32 dim 1 : vector<16x256xf32>, i32 -> vector<16x256xf32>
    %c4_46 = arith.constant 4 : index
    %c0_47 = arith.constant 0 : index
    %111 = vector.load %arg6[%c4_46, %c0_47] : memref<25x256xf32, #tpu.memory_space<vmem>>, vector<1x256xf32>
    %112 = vector.broadcast %111 : vector<1x256xf32> to vector<16x256xf32>
    %113 = arith.mulf %110, %112 : vector<16x256xf32>
    %c0_48 = arith.constant 0 : index
    %c4_49 = arith.constant 4 : index
    %114 = vector.load %arg5[%c0_48, %c4_49] : memref<16x25xf32, #tpu.memory_space<vmem>>, vector<16x1xf32>
    %115 = vector.broadcast %114 : vector<16x1xf32> to vector<16x256xf32>
    %116 = arith.mulf %113, %115 : vector<16x256xf32>
    %117 = arith.addf %109, %116 : vector<16x256xf32>
    %c18_i32 = arith.constant 18 : i32
    %118 = tpu.dynamic_rotate %5 by %c18_i32 dim 1 : vector<16x256xf32>, i32 -> vector<16x256xf32>
    %c5_50 = arith.constant 5 : index
    %c0_51 = arith.constant 0 : index
    %119 = vector.load %arg6[%c5_50, %c0_51] : memref<25x256xf32, #tpu.memory_space<vmem>>, vector<1x256xf32>
    %120 = vector.broadcast %119 : vector<1x256xf32> to vector<16x256xf32>
    %121 = arith.mulf %118, %120 : vector<16x256xf32>
    %c0_52 = arith.constant 0 : index
    %c5_53 = arith.constant 5 : index
    %122 = vector.load %arg5[%c0_52, %c5_53] : memref<16x25xf32, #tpu.memory_space<vmem>>, vector<16x1xf32>
    %123 = vector.broadcast %122 : vector<16x1xf32> to vector<16x256xf32>
    %124 = arith.mulf %121, %123 : vector<16x256xf32>
    %125 = arith.addf %117, %124 : vector<16x256xf32>
    %c17_i32_54 = arith.constant 17 : i32
    %126 = tpu.dynamic_rotate %5 by %c17_i32_54 dim 1 : vector<16x256xf32>, i32 -> vector<16x256xf32>
    %c6_55 = arith.constant 6 : index
    %c0_56 = arith.constant 0 : index
    %127 = vector.load %arg6[%c6_55, %c0_56] : memref<25x256xf32, #tpu.memory_space<vmem>>, vector<1x256xf32>
    %128 = vector.broadcast %127 : vector<1x256xf32> to vector<16x256xf32>
    %129 = arith.mulf %126, %128 : vector<16x256xf32>
    %c0_57 = arith.constant 0 : index
    %c6_58 = arith.constant 6 : index
    %130 = vector.load %arg5[%c0_57, %c6_58] : memref<16x25xf32, #tpu.memory_space<vmem>>, vector<16x1xf32>
    %131 = vector.broadcast %130 : vector<16x1xf32> to vector<16x256xf32>
    %132 = arith.mulf %129, %131 : vector<16x256xf32>
    %133 = arith.addf %125, %132 : vector<16x256xf32>
    %c16_i32_59 = arith.constant 16 : i32
    %134 = tpu.dynamic_rotate %5 by %c16_i32_59 dim 1 : vector<16x256xf32>, i32 -> vector<16x256xf32>
    %c7_60 = arith.constant 7 : index
    %c0_61 = arith.constant 0 : index
    %135 = vector.load %arg6[%c7_60, %c0_61] : memref<25x256xf32, #tpu.memory_space<vmem>>, vector<1x256xf32>
    %136 = vector.broadcast %135 : vector<1x256xf32> to vector<16x256xf32>
    %137 = arith.mulf %134, %136 : vector<16x256xf32>
    %c0_62 = arith.constant 0 : index
    %c7_63 = arith.constant 7 : index
    %138 = vector.load %arg5[%c0_62, %c7_63] : memref<16x25xf32, #tpu.memory_space<vmem>>, vector<16x1xf32>
    %139 = vector.broadcast %138 : vector<16x1xf32> to vector<16x256xf32>
    %140 = arith.mulf %137, %139 : vector<16x256xf32>
    %141 = arith.addf %133, %140 : vector<16x256xf32>
    %c15_i32_64 = arith.constant 15 : i32
    %142 = tpu.dynamic_rotate %5 by %c15_i32_64 dim 1 : vector<16x256xf32>, i32 -> vector<16x256xf32>
    %c8_65 = arith.constant 8 : index
    %c0_66 = arith.constant 0 : index
    %143 = vector.load %arg6[%c8_65, %c0_66] : memref<25x256xf32, #tpu.memory_space<vmem>>, vector<1x256xf32>
    %144 = vector.broadcast %143 : vector<1x256xf32> to vector<16x256xf32>
    %145 = arith.mulf %142, %144 : vector<16x256xf32>
    %c0_67 = arith.constant 0 : index
    %c8_68 = arith.constant 8 : index
    %146 = vector.load %arg5[%c0_67, %c8_68] : memref<16x25xf32, #tpu.memory_space<vmem>>, vector<16x1xf32>
    %147 = vector.broadcast %146 : vector<16x1xf32> to vector<16x256xf32>
    %148 = arith.mulf %145, %147 : vector<16x256xf32>
    %149 = arith.addf %141, %148 : vector<16x256xf32>
    %c14_i32 = arith.constant 14 : i32
    %150 = tpu.dynamic_rotate %5 by %c14_i32 dim 1 : vector<16x256xf32>, i32 -> vector<16x256xf32>
    %c9 = arith.constant 9 : index
    %c0_69 = arith.constant 0 : index
    %151 = vector.load %arg6[%c9, %c0_69] : memref<25x256xf32, #tpu.memory_space<vmem>>, vector<1x256xf32>
    %152 = vector.broadcast %151 : vector<1x256xf32> to vector<16x256xf32>
    %153 = arith.mulf %150, %152 : vector<16x256xf32>
    %c0_70 = arith.constant 0 : index
    %c9_71 = arith.constant 9 : index
    %154 = vector.load %arg5[%c0_70, %c9_71] : memref<16x25xf32, #tpu.memory_space<vmem>>, vector<16x1xf32>
    %155 = vector.broadcast %154 : vector<16x1xf32> to vector<16x256xf32>
    %156 = arith.mulf %153, %155 : vector<16x256xf32>
    %157 = arith.addf %149, %156 : vector<16x256xf32>
    %c2_i32 = arith.constant 2 : i32
    %158 = tpu.dynamic_rotate %5 by %c2_i32 dim 1 : vector<16x256xf32>, i32 -> vector<16x256xf32>
    %c10 = arith.constant 10 : index
    %c0_72 = arith.constant 0 : index
    %159 = vector.load %arg6[%c10, %c0_72] : memref<25x256xf32, #tpu.memory_space<vmem>>, vector<1x256xf32>
    %160 = vector.broadcast %159 : vector<1x256xf32> to vector<16x256xf32>
    %161 = arith.mulf %158, %160 : vector<16x256xf32>
    %c0_73 = arith.constant 0 : index
    %c10_74 = arith.constant 10 : index
    %162 = vector.load %arg5[%c0_73, %c10_74] : memref<16x25xf32, #tpu.memory_space<vmem>>, vector<16x1xf32>
    %163 = vector.broadcast %162 : vector<16x1xf32> to vector<16x256xf32>
    %164 = arith.mulf %161, %163 : vector<16x256xf32>
    %165 = arith.addf %157, %164 : vector<16x256xf32>
    %c1_i32_75 = arith.constant 1 : i32
    %166 = tpu.dynamic_rotate %5 by %c1_i32_75 dim 1 : vector<16x256xf32>, i32 -> vector<16x256xf32>
    %c11_76 = arith.constant 11 : index
    %c0_77 = arith.constant 0 : index
    %167 = vector.load %arg6[%c11_76, %c0_77] : memref<25x256xf32, #tpu.memory_space<vmem>>, vector<1x256xf32>
    %168 = vector.broadcast %167 : vector<1x256xf32> to vector<16x256xf32>
    %169 = arith.mulf %166, %168 : vector<16x256xf32>
    %c0_78 = arith.constant 0 : index
    %c11_79 = arith.constant 11 : index
    %170 = vector.load %arg5[%c0_78, %c11_79] : memref<16x25xf32, #tpu.memory_space<vmem>>, vector<16x1xf32>
    %171 = vector.broadcast %170 : vector<16x1xf32> to vector<16x256xf32>
    %172 = arith.mulf %169, %171 : vector<16x256xf32>
    %173 = arith.addf %165, %172 : vector<16x256xf32>
    %c255_i32_80 = arith.constant 255 : i32
    %174 = tpu.dynamic_rotate %5 by %c255_i32_80 dim 1 : vector<16x256xf32>, i32 -> vector<16x256xf32>
    %c13_81 = arith.constant 13 : index
    %c0_82 = arith.constant 0 : index
    %175 = vector.load %arg6[%c13_81, %c0_82] : memref<25x256xf32, #tpu.memory_space<vmem>>, vector<1x256xf32>
    %176 = vector.broadcast %175 : vector<1x256xf32> to vector<16x256xf32>
    %177 = arith.mulf %174, %176 : vector<16x256xf32>
    %c0_83 = arith.constant 0 : index
    %c13_84 = arith.constant 13 : index
    %178 = vector.load %arg5[%c0_83, %c13_84] : memref<16x25xf32, #tpu.memory_space<vmem>>, vector<16x1xf32>
    %179 = vector.broadcast %178 : vector<16x1xf32> to vector<16x256xf32>
    %180 = arith.mulf %177, %179 : vector<16x256xf32>
    %181 = arith.addf %173, %180 : vector<16x256xf32>
    %c254_i32 = arith.constant 254 : i32
    %182 = tpu.dynamic_rotate %5 by %c254_i32 dim 1 : vector<16x256xf32>, i32 -> vector<16x256xf32>
    %c14 = arith.constant 14 : index
    %c0_85 = arith.constant 0 : index
    %183 = vector.load %arg6[%c14, %c0_85] : memref<25x256xf32, #tpu.memory_space<vmem>>, vector<1x256xf32>
    %184 = vector.broadcast %183 : vector<1x256xf32> to vector<16x256xf32>
    %185 = arith.mulf %182, %184 : vector<16x256xf32>
    %c0_86 = arith.constant 0 : index
    %c14_87 = arith.constant 14 : index
    %186 = vector.load %arg5[%c0_86, %c14_87] : memref<16x25xf32, #tpu.memory_space<vmem>>, vector<16x1xf32>
    %187 = vector.broadcast %186 : vector<16x1xf32> to vector<16x256xf32>
    %188 = arith.mulf %185, %187 : vector<16x256xf32>
    %189 = arith.addf %181, %188 : vector<16x256xf32>
    %c242_i32 = arith.constant 242 : i32
    %190 = tpu.dynamic_rotate %5 by %c242_i32 dim 1 : vector<16x256xf32>, i32 -> vector<16x256xf32>
    %c15 = arith.constant 15 : index
    %c0_88 = arith.constant 0 : index
    %191 = vector.load %arg6[%c15, %c0_88] : memref<25x256xf32, #tpu.memory_space<vmem>>, vector<1x256xf32>
    %192 = vector.broadcast %191 : vector<1x256xf32> to vector<16x256xf32>
    %193 = arith.mulf %190, %192 : vector<16x256xf32>
    %c0_89 = arith.constant 0 : index
    %c15_90 = arith.constant 15 : index
    %194 = vector.load %arg5[%c0_89, %c15_90] : memref<16x25xf32, #tpu.memory_space<vmem>>, vector<16x1xf32>
    %195 = vector.broadcast %194 : vector<16x1xf32> to vector<16x256xf32>
    %196 = arith.mulf %193, %195 : vector<16x256xf32>
    %197 = arith.addf %189, %196 : vector<16x256xf32>
    %c241_i32_91 = arith.constant 241 : i32
    %198 = tpu.dynamic_rotate %5 by %c241_i32_91 dim 1 : vector<16x256xf32>, i32 -> vector<16x256xf32>
    %c16_92 = arith.constant 16 : index
    %c0_93 = arith.constant 0 : index
    %199 = vector.load %arg6[%c16_92, %c0_93] : memref<25x256xf32, #tpu.memory_space<vmem>>, vector<1x256xf32>
    %200 = vector.broadcast %199 : vector<1x256xf32> to vector<16x256xf32>
    %201 = arith.mulf %198, %200 : vector<16x256xf32>
    %c0_94 = arith.constant 0 : index
    %c16_95 = arith.constant 16 : index
    %202 = vector.load %arg5[%c0_94, %c16_95] : memref<16x25xf32, #tpu.memory_space<vmem>>, vector<16x1xf32>
    %203 = vector.broadcast %202 : vector<16x1xf32> to vector<16x256xf32>
    %204 = arith.mulf %201, %203 : vector<16x256xf32>
    %205 = arith.addf %197, %204 : vector<16x256xf32>
    %c240_i32_96 = arith.constant 240 : i32
    %206 = tpu.dynamic_rotate %5 by %c240_i32_96 dim 1 : vector<16x256xf32>, i32 -> vector<16x256xf32>
    %c17_97 = arith.constant 17 : index
    %c0_98 = arith.constant 0 : index
    %207 = vector.load %arg6[%c17_97, %c0_98] : memref<25x256xf32, #tpu.memory_space<vmem>>, vector<1x256xf32>
    %208 = vector.broadcast %207 : vector<1x256xf32> to vector<16x256xf32>
    %209 = arith.mulf %206, %208 : vector<16x256xf32>
    %c0_99 = arith.constant 0 : index
    %c17_100 = arith.constant 17 : index
    %210 = vector.load %arg5[%c0_99, %c17_100] : memref<16x25xf32, #tpu.memory_space<vmem>>, vector<16x1xf32>
    %211 = vector.broadcast %210 : vector<16x1xf32> to vector<16x256xf32>
    %212 = arith.mulf %209, %211 : vector<16x256xf32>
    %213 = arith.addf %205, %212 : vector<16x256xf32>
    %c239_i32_101 = arith.constant 239 : i32
    %214 = tpu.dynamic_rotate %5 by %c239_i32_101 dim 1 : vector<16x256xf32>, i32 -> vector<16x256xf32>
    %c18_102 = arith.constant 18 : index
    %c0_103 = arith.constant 0 : index
    %215 = vector.load %arg6[%c18_102, %c0_103] : memref<25x256xf32, #tpu.memory_space<vmem>>, vector<1x256xf32>
    %216 = vector.broadcast %215 : vector<1x256xf32> to vector<16x256xf32>
    %217 = arith.mulf %214, %216 : vector<16x256xf32>
    %c0_104 = arith.constant 0 : index
    %c18_105 = arith.constant 18 : index
    %218 = vector.load %arg5[%c0_104, %c18_105] : memref<16x25xf32, #tpu.memory_space<vmem>>, vector<16x1xf32>
    %219 = vector.broadcast %218 : vector<16x1xf32> to vector<16x256xf32>
    %220 = arith.mulf %217, %219 : vector<16x256xf32>
    %221 = arith.addf %213, %220 : vector<16x256xf32>
    %c238_i32 = arith.constant 238 : i32
    %222 = tpu.dynamic_rotate %5 by %c238_i32 dim 1 : vector<16x256xf32>, i32 -> vector<16x256xf32>
    %c19 = arith.constant 19 : index
    %c0_106 = arith.constant 0 : index
    %223 = vector.load %arg6[%c19, %c0_106] : memref<25x256xf32, #tpu.memory_space<vmem>>, vector<1x256xf32>
    %224 = vector.broadcast %223 : vector<1x256xf32> to vector<16x256xf32>
    %225 = arith.mulf %222, %224 : vector<16x256xf32>
    %c0_107 = arith.constant 0 : index
    %c19_108 = arith.constant 19 : index
    %226 = vector.load %arg5[%c0_107, %c19_108] : memref<16x25xf32, #tpu.memory_space<vmem>>, vector<16x1xf32>
    %227 = vector.broadcast %226 : vector<16x1xf32> to vector<16x256xf32>
    %228 = arith.mulf %225, %227 : vector<16x256xf32>
    %229 = arith.addf %221, %228 : vector<16x256xf32>
    %c226_i32 = arith.constant 226 : i32
    %230 = tpu.dynamic_rotate %5 by %c226_i32 dim 1 : vector<16x256xf32>, i32 -> vector<16x256xf32>
    %c20 = arith.constant 20 : index
    %c0_109 = arith.constant 0 : index
    %231 = vector.load %arg6[%c20, %c0_109] : memref<25x256xf32, #tpu.memory_space<vmem>>, vector<1x256xf32>
    %232 = vector.broadcast %231 : vector<1x256xf32> to vector<16x256xf32>
    %233 = arith.mulf %230, %232 : vector<16x256xf32>
    %c0_110 = arith.constant 0 : index
    %c20_111 = arith.constant 20 : index
    %234 = vector.load %arg5[%c0_110, %c20_111] : memref<16x25xf32, #tpu.memory_space<vmem>>, vector<16x1xf32>
    %235 = vector.broadcast %234 : vector<16x1xf32> to vector<16x256xf32>
    %236 = arith.mulf %233, %235 : vector<16x256xf32>
    %237 = arith.addf %229, %236 : vector<16x256xf32>
    %c225_i32 = arith.constant 225 : i32
    %238 = tpu.dynamic_rotate %5 by %c225_i32 dim 1 : vector<16x256xf32>, i32 -> vector<16x256xf32>
    %c21 = arith.constant 21 : index
    %c0_112 = arith.constant 0 : index
    %239 = vector.load %arg6[%c21, %c0_112] : memref<25x256xf32, #tpu.memory_space<vmem>>, vector<1x256xf32>
    %240 = vector.broadcast %239 : vector<1x256xf32> to vector<16x256xf32>
    %241 = arith.mulf %238, %240 : vector<16x256xf32>
    %c0_113 = arith.constant 0 : index
    %c21_114 = arith.constant 21 : index
    %242 = vector.load %arg5[%c0_113, %c21_114] : memref<16x25xf32, #tpu.memory_space<vmem>>, vector<16x1xf32>
    %243 = vector.broadcast %242 : vector<16x1xf32> to vector<16x256xf32>
    %244 = arith.mulf %241, %243 : vector<16x256xf32>
    %245 = arith.addf %237, %244 : vector<16x256xf32>
    %c224_i32 = arith.constant 224 : i32
    %246 = tpu.dynamic_rotate %5 by %c224_i32 dim 1 : vector<16x256xf32>, i32 -> vector<16x256xf32>
    %c22 = arith.constant 22 : index
    %c0_115 = arith.constant 0 : index
    %247 = vector.load %arg6[%c22, %c0_115] : memref<25x256xf32, #tpu.memory_space<vmem>>, vector<1x256xf32>
    %248 = vector.broadcast %247 : vector<1x256xf32> to vector<16x256xf32>
    %249 = arith.mulf %246, %248 : vector<16x256xf32>
    %c0_116 = arith.constant 0 : index
    %c22_117 = arith.constant 22 : index
    %250 = vector.load %arg5[%c0_116, %c22_117] : memref<16x25xf32, #tpu.memory_space<vmem>>, vector<16x1xf32>
    %251 = vector.broadcast %250 : vector<16x1xf32> to vector<16x256xf32>
    %252 = arith.mulf %249, %251 : vector<16x256xf32>
    %253 = arith.addf %245, %252 : vector<16x256xf32>
    %c223_i32 = arith.constant 223 : i32
    %254 = tpu.dynamic_rotate %5 by %c223_i32 dim 1 : vector<16x256xf32>, i32 -> vector<16x256xf32>
    %c23 = arith.constant 23 : index
    %c0_118 = arith.constant 0 : index
    %255 = vector.load %arg6[%c23, %c0_118] : memref<25x256xf32, #tpu.memory_space<vmem>>, vector<1x256xf32>
    %256 = vector.broadcast %255 : vector<1x256xf32> to vector<16x256xf32>
    %257 = arith.mulf %254, %256 : vector<16x256xf32>
    %c0_119 = arith.constant 0 : index
    %c23_120 = arith.constant 23 : index
    %258 = vector.load %arg5[%c0_119, %c23_120] : memref<16x25xf32, #tpu.memory_space<vmem>>, vector<16x1xf32>
    %259 = vector.broadcast %258 : vector<16x1xf32> to vector<16x256xf32>
    %260 = arith.mulf %257, %259 : vector<16x256xf32>
    %261 = arith.addf %253, %260 : vector<16x256xf32>
    %c222_i32 = arith.constant 222 : i32
    %262 = tpu.dynamic_rotate %5 by %c222_i32 dim 1 : vector<16x256xf32>, i32 -> vector<16x256xf32>
    %c24 = arith.constant 24 : index
    %c0_121 = arith.constant 0 : index
    %263 = vector.load %arg6[%c24, %c0_121] : memref<25x256xf32, #tpu.memory_space<vmem>>, vector<1x256xf32>
    %264 = vector.broadcast %263 : vector<1x256xf32> to vector<16x256xf32>
    %265 = arith.mulf %262, %264 : vector<16x256xf32>
    %c0_122 = arith.constant 0 : index
    %c24_123 = arith.constant 24 : index
    %266 = vector.load %arg5[%c0_122, %c24_123] : memref<16x25xf32, #tpu.memory_space<vmem>>, vector<16x1xf32>
    %267 = vector.broadcast %266 : vector<16x1xf32> to vector<16x256xf32>
    %268 = arith.mulf %265, %267 : vector<16x256xf32>
    %269 = arith.addf %261, %268 : vector<16x256xf32>
    %cst_124 = arith.constant 0.000000e+00 : f32
    %270 = vector.broadcast %cst_124 : f32 to vector<16x256xf32>
    %271 = arith.maximumf %269, %270 : vector<16x256xf32>
    %c0_125 = arith.constant 0 : index
    %c0_126 = arith.constant 0 : index
    %272 = vector.load %arg7[%c0_125, %c0_126] : memref<8x16xbf16, #tpu.memory_space<vmem>>, vector<8x16xbf16>
    %273 = arith.truncf %74 : vector<16x256xf32> to vector<16x256xbf16>
    %cst_127 = arith.constant dense<0.000000e+00> : vector<8x256xf32>
    %274 = tpu.matmul %272, %273, %cst_127 {dimension_numbers = #tpu.dot_dimension_numbers<[1], [0], [0], [1], [0, 0, 1, 1], [], []>} : vector<8x16xbf16>, vector<16x256xbf16>, vector<8x256xf32> -> vector<8x256xf32>
    %c0_128 = arith.constant 0 : index
    %c0_129 = arith.constant 0 : index
    %275 = vector.load %arg8[%c0_128, %c0_129] : memref<8x16xbf16, #tpu.memory_space<vmem>>, vector<8x16xbf16>
    %276 = arith.truncf %271 : vector<16x256xf32> to vector<16x256xbf16>
    %cst_130 = arith.constant dense<0.000000e+00> : vector<8x256xf32>
    %277 = tpu.matmul %275, %276, %cst_130 {dimension_numbers = #tpu.dot_dimension_numbers<[1], [0], [0], [1], [0, 0, 1, 1], [], []>} : vector<8x16xbf16>, vector<16x256xbf16>, vector<8x256xf32> -> vector<8x256xf32>
    %278 = arith.addf %274, %277 : vector<8x256xf32>
    %cst_131 = arith.constant dense<0.000000e+00> : vector<8xf32>
    %279 = vector.multi_reduction <add>, %278, %cst_131 [1] : vector<8x256xf32> to vector<8xf32>
    %280 = vector.shape_cast %279 : vector<8xf32> to vector<8x1xf32>
    %cst_132 = arith.constant 2.560000e+02 : f32
    %281 = vector.broadcast %cst_132 : f32 to vector<8x1xf32>
    %282 = arith.divf %280, %281 : vector<8x1xf32>
    %283 = tpu.iota {dimensions = array<i32: 0>} : vector<8x1xi32>
    %c1_i32_133 = arith.constant 1 : i32
    %284 = vector.broadcast %c1_i32_133 : i32 to vector<8x1xi32>
    %285 = arith.cmpi sge, %283, %284 : vector<8x1xi32>
    %c1_i32_134 = arith.constant 1 : i32
    %286 = tpu.dynamic_rotate %282 by %c1_i32_134 dim 0 : vector<8x1xf32>, i32 -> vector<8x1xf32>
    %cst_135 = arith.constant 0.000000e+00 : f32
    %287 = vector.broadcast %cst_135 : f32 to vector<8x1xf32>
    %288 = arith.select %285, %286, %287 : vector<8x1xi1>, vector<8x1xf32>
    %c6_i32 = arith.constant 6 : i32
    %289 = vector.broadcast %c6_i32 : i32 to vector<8x1xi32>
    %290 = arith.cmpi sle, %283, %289 : vector<8x1xi32>
    %c7_i32 = arith.constant 7 : i32
    %291 = tpu.dynamic_rotate %282 by %c7_i32 dim 0 : vector<8x1xf32>, i32 -> vector<8x1xf32>
    %cst_136 = arith.constant 0.000000e+00 : f32
    %292 = vector.broadcast %cst_136 : f32 to vector<8x1xf32>
    %293 = arith.select %290, %291, %292 : vector<8x1xi1>, vector<8x1xf32>
    %c0_137 = arith.constant 0 : index
    %294 = memref.load %arg9[%c0_137] : memref<3xf32, #tpu.memory_space<smem>>
    %295 = vector.broadcast %294 : f32 to vector<8x1xf32>
    %296 = arith.mulf %295, %288 : vector<8x1xf32>
    %c1_138 = arith.constant 1 : index
    %297 = memref.load %arg9[%c1_138] : memref<3xf32, #tpu.memory_space<smem>>
    %298 = vector.broadcast %297 : f32 to vector<8x1xf32>
    %299 = arith.mulf %298, %282 : vector<8x1xf32>
    %300 = arith.addf %296, %299 : vector<8x1xf32>
    %c2_139 = arith.constant 2 : index
    %301 = memref.load %arg9[%c2_139] : memref<3xf32, #tpu.memory_space<smem>>
    %302 = vector.broadcast %301 : f32 to vector<8x1xf32>
    %303 = arith.mulf %302, %293 : vector<8x1xf32>
    %304 = arith.addf %300, %303 : vector<8x1xf32>
    %cst_140 = arith.constant 0.000000e+00 : f32
    %305 = vector.broadcast %cst_140 : f32 to vector<8x1xf32>
    %306 = arith.subf %305, %304 : vector<8x1xf32>
    %307 = math.exp %306 : vector<8x1xf32>
    %cst_141 = arith.constant 1.000000e+00 : f32
    %308 = vector.broadcast %cst_141 : f32 to vector<8x1xf32>
    %309 = arith.addf %308, %307 : vector<8x1xf32>
    %cst_142 = arith.constant 1.000000e+00 : f32
    %310 = vector.broadcast %cst_142 : f32 to vector<8x1xf32>
    %311 = arith.divf %310, %309 : vector<8x1xf32>
    %312 = vector.broadcast %311 : vector<8x1xf32> to vector<8x256xf32>
    %313 = arith.mulf %278, %312 : vector<8x256xf32>
    %c0_143 = arith.constant 0 : index
    %c0_144 = arith.constant 0 : index
    %c0_145 = arith.constant 0 : index
    %314 = vector.load %arg10[%c0_143, %c0_144, %c0_145] : memref<1x8x256xf32, #tpu.memory_space<vmem>>, vector<1x8x256xf32>
    %315 = vector.shape_cast %314 : vector<1x8x256xf32> to vector<8x256xf32>
    %316 = vector.shape_cast %313 : vector<8x256xf32> to vector<1x8x256xf32>
    tpu.vector_store %arg10[%c0_143, %c0_144, %c0_145], %316 {strides = array<i32>} : memref<1x8x256xf32, #tpu.memory_space<vmem>>, vector<1x8x256xf32>,
    return
  }
  func.func @transform_0(%arg0: i32) -> (i32, i32, i32) {
    %c0_i32 = arith.constant 0 : i32
    %c0_i32_0 = arith.constant 0 : i32
    %c0_i32_1 = arith.constant 0 : i32
    return %arg0, %c0_i32, %c0_i32_0 : i32, i32, i32
  }
  func.func @transform_1(%arg0: i32) -> (i32, i32) {
    %c0_i32 = arith.constant 0 : i32
    %c0_i32_0 = arith.constant 0 : i32
    %c0_i32_1 = arith.constant 0 : i32
    return %c0_i32, %c0_i32_0 : i32, i32
  }
  func.func @transform_2(%arg0: i32) -> (i32, i32) {
    %c0_i32 = arith.constant 0 : i32
    %c0_i32_0 = arith.constant 0 : i32
    %c0_i32_1 = arith.constant 0 : i32
    return %c0_i32, %c0_i32_0 : i32, i32
  }
  func.func @transform_3(%arg0: i32) -> (i32, i32) {
    %c0_i32 = arith.constant 0 : i32
    %c0_i32_0 = arith.constant 0 : i32
    %c0_i32_1 = arith.constant 0 : i32
    return %c0_i32, %c0_i32_0 : i32, i32
  }
  func.func @transform_4(%arg0: i32) -> (i32, i32) {
    %c0_i32 = arith.constant 0 : i32
    %c0_i32_0 = arith.constant 0 : i32
    %c0_i32_1 = arith.constant 0 : i32
    return %c0_i32, %c0_i32_0 : i32, i32
  }
  func.func @transform_5(%arg0: i32) -> (i32, i32) {
    %c0_i32 = arith.constant 0 : i32
    %c0_i32_0 = arith.constant 0 : i32
    %c0_i32_1 = arith.constant 0 : i32
    return %c0_i32, %c0_i32_0 : i32, i32
  }
  func.func @transform_6(%arg0: i32) -> (i32, i32) {
    %c0_i32 = arith.constant 0 : i32
    %c0_i32_0 = arith.constant 0 : i32
    %c0_i32_1 = arith.constant 0 : i32
    return %c0_i32, %c0_i32_0 : i32, i32
  }
  func.func @transform_7(%arg0: i32) -> (i32, i32) {
    %c0_i32 = arith.constant 0 : i32
    %c0_i32_0 = arith.constant 0 : i32
    %c0_i32_1 = arith.constant 0 : i32
    return %c0_i32, %c0_i32_0 : i32, i32
  }
  func.func @transform_8(%arg0: i32) -> i32 {
    %c0_i32 = arith.constant 0 : i32
    %c0_i32_0 = arith.constant 0 : i32
    return %c0_i32 : i32
  }
  func.func @transform_9(%arg0: i32) -> (i32, i32, i32) {
    %c0_i32 = arith.constant 0 : i32
    %c0_i32_0 = arith.constant 0 : i32
    %c0_i32_1 = arith.constant 0 : i32
    return %arg0, %c0_i32, %c0_i32_0 : i32, i32, i32
  }
}

</mosaic_0001>

<llo_original>
// kernel: feed_forward.1
$region0: #{feed_forward.1}
  #allocation0 [shape = 'u32[]', space=smem, size = 0x4, offset = 0x4, fixed_abs, tag = 'smem constant byte address 0x4 - core index']
  #allocation1 [shape = 'u32[72,128]{1,0:T(1,128)}', space=vmem, size = 0x9000, scoped, tag = 'internal scratch']
  %s0 = inlined_call_operand.vmem [shape: bf16[2,8,256], index: 0, kind: input, shape index: {}]
  %s1 = inlined_call_operand.vmem [shape: bf16[16,8], index: 1, kind: input, shape index: {}]
  %s2 = inlined_call_operand.vmem [shape: bf16[16,8], index: 2, kind: input, shape index: {}]
  %s3 = inlined_call_operand.vmem [shape: f32[16,9], index: 3, kind: input, shape index: {}]
  %s4 = inlined_call_operand.vmem [shape: f32[16,25], index: 4, kind: input, shape index: {}]
  %s5 = inlined_call_operand.vmem [shape: f32[25,256], index: 5, kind: input, shape index: {}]
  %s6 = inlined_call_operand.vmem [shape: bf16[8,16], index: 6, kind: input, shape index: {}]
  %s7 = inlined_call_operand.vmem [shape: bf16[8,16], index: 7, kind: input, shape index: {}]
  %s8 = inlined_call_operand.vmem [shape: f32[3], index: 8, kind: input, shape index: {}]
  %s9 = inlined_call_operand.vmem [shape: f32[2,8,256], index: 9, kind: output, shape index: {}]
  %s10 = sld [smem:[#allocation0]]
  $region73: #{feed_forward.1} parent=0
    _
  %s12 = ssub.s32 1, %s10
  %s13 = scalar_select 0, %s12, %s10
  $region1: #{feed_forward.1} parent=0
    #allocation2 [shape = 'u8[512]{0}', space=smem, size = 0x200, scoped, tag = 'input window, operand 8, single buffered']
    #allocation3 [shape = 's32[2]{0}', space=sflag, size = 0x8, scoped, tag = 'scoped memory for feed_forward.1']
    %14 = vsyncpa [#allocation3], 0
    loop: start=0, step=1, limit=4
    $region2: #{feed_forward.1} parent=1 // loop_pre_header
      _
    $region3: #{feed_forward.1} parent=1 // loop_header
      %s16 = sphi 0, %s20
      %p17 = scmp.ge.s32.totalorder %s16, 4
      %s26 = sphi 0, %s28
      %s29 = sphi 0, %s26
      %s30 = sphi 0, %s29
      %s46 = sphi 0, %s30
      %s50 = sphi 0, %s50
      %s52 = sphi 0, %s50
      %s53 = sphi 0, %s52
      %s67 = sphi 0, %s53
      %s71 = sphi 0, %s71
      %s73 = sphi 0, %s71
      %s74 = sphi 0, %s73
      %s88 = sphi 0, %s74
      %s92 = sphi 0, %s92
      %s94 = sphi 0, %s92
      %s95 = sphi 0, %s94
      %s109 = sphi 0, %s95
      %s113 = sphi 0, %s113
      %s115 = sphi 0, %s113
      %s116 = sphi 0, %s115
      %s130 = sphi 0, %s116
      %s134 = sphi 0, %s134
      %s136 = sphi 0, %s134
      %s137 = sphi 0, %s136
      %s151 = sphi 0, %s137
      %s155 = sphi 0, %s155
      %s157 = sphi 0, %s155
      %s158 = sphi 0, %s157
      %s172 = sphi 0, %s158
      %s176 = sphi 0, %s176
      %s178 = sphi 0, %s176
      %s179 = sphi 0, %s178
      %s193 = sphi 0, %s179
      %s197 = sphi 0, %s197
      %s199 = sphi 0, %s197
      %s200 = sphi 0, %s199
      %s214 = sphi 0, %s200
      %s220 = sphi 0, %s222
      %s223 = sphi 0, %s220
      %s224 = sphi 0, %s223
      %s240 = sphi 0, %s224
    $region4: #{feed_forward.1} parent=1 // loop_header_branch
      %19 = sbr.rel (%p17) target = $region8
    $region5: #{feed_forward.1} parent=1 // loop_body
      %s21 = ssub.s32 %s16, 1
      %s22 = ssub.s32 %s16, 2
      %s23 = sadd.s32 %s16, 1
      %s24 = ssub.s32 %s16, %s23
      %p25 = scmp.eq.s32.totalorder %s24, 0
      %s27 = sadd.s32 %s26, 1
      %s28 = scalar_select %p25, %s26, %s27
      %p31 = pneg %p25
      %p32 = scmp.eq.s32.totalorder %s16, 1
      %p33 = por %p31, %p32
      %p34 = scmp.ne.s32.totalorder %s26, %s29
      %p35 = scmp.eq.s32.totalorder %s16, 0
      %p36 = por %p34, %p35
      %p37 = scmp.ne.s32.totalorder %s26, %s29
      %p38 = scmp.eq.s32.totalorder %s21, 1
      %p39 = por %p37, %p38
      %p40 = scmp.ne.s32.totalorder %s29, %s30
      %p41 = scmp.eq.s32.totalorder %s21, 0
      %p42 = por %p40, %p41
      %p43 = scmp.ne.s32.totalorder %s29, %s30
      %p44 = scmp.eq.s32.totalorder %s22, 1
      %p45 = por %p43, %p44
      %p47 = scmp.ne.s32.totalorder %s30, %s46
      %p48 = scmp.eq.s32.totalorder %s22, 0
      %p49 = por %p47, %p48
      %s51 = sadd.s32 %s50, 1
      %p54 = scmp.eq.s32.totalorder %s16, 1
      %p55 = scmp.ne.s32.totalorder %s50, %s52
      %p56 = scmp.eq.s32.totalorder %s16, 0
      %p57 = por %p55, %p56
      %p58 = scmp.ne.s32.totalorder %s50, %s52
      %p59 = scmp.eq.s32.totalorder %s21, 1
      %p60 = por %p58, %p59
      %p61 = scmp.ne.s32.totalorder %s52, %s53
      %p62 = scmp.eq.s32.totalorder %s21, 0
      %p63 = por %p61, %p62
      %p64 = scmp.ne.s32.totalorder %s52, %s53
      %p65 = scmp.eq.s32.totalorder %s22, 1
      %p66 = por %p64, %p65
      %p68 = scmp.ne.s32.totalorder %s53, %s67
      %p69 = scmp.eq.s32.totalorder %s22, 0
      %p70 = por %p68, %p69
      %s72 = sadd.s32 %s71, 1
      %p75 = scmp.eq.s32.totalorder %s16, 1
      %p76 = scmp.ne.s32.totalorder %s71, %s73
      %p77 = scmp.eq.s32.totalorder %s16, 0
      %p78 = por %p76, %p77
      %p79 = scmp.ne.s32.totalorder %s71, %s73
      %p80 = scmp.eq.s32.totalorder %s21, 1
      %p81 = por %p79, %p80
      %p82 = scmp.ne.s32.totalorder %s73, %s74
      %p83 = scmp.eq.s32.totalorder %s21, 0
      %p84 = por %p82, %p83
      %p85 = scmp.ne.s32.totalorder %s73, %s74
      %p86 = scmp.eq.s32.totalorder %s22, 1
      %p87 = por %p85, %p86
      %p89 = scmp.ne.s32.totalorder %s74, %s88
      %p90 = scmp.eq.s32.totalorder %s22, 0
      %p91 = por %p89, %p90
      %s93 = sadd.s32 %s92, 1
      %p96 = scmp.eq.s32.totalorder %s16, 1
      %p97 = scmp.ne.s32.totalorder %s92, %s94
      %p98 = scmp.eq.s32.totalorder %s16, 0
      %p99 = por %p97, %p98
      %p100 = scmp.ne.s32.totalorder %s92, %s94
      %p101 = scmp.eq.s32.totalorder %s21, 1
      %p102 = por %p100, %p101
      %p103 = scmp.ne.s32.totalorder %s94, %s95
      %p104 = scmp.eq.s32.totalorder %s21, 0
      %p105 = por %p103, %p104
      %p106 = scmp.ne.s32.totalorder %s94, %s95
      %p107 = scmp.eq.s32.totalorder %s22, 1
      %p108 = por %p106, %p107
      %p110 = scmp.ne.s32.totalorder %s95, %s109
      %p111 = scmp.eq.s32.totalorder %s22, 0
      %p112 = por %p110, %p111
      %s114 = sadd.s32 %s113, 1
      %p117 = scmp.eq.s32.totalorder %s16, 1
      %p118 = scmp.ne.s32.totalorder %s113, %s115
      %p119 = scmp.eq.s32.totalorder %s16, 0
      %p120 = por %p118, %p119
      %p121 = scmp.ne.s32.totalorder %s113, %s115
      %p122 = scmp.eq.s32.totalorder %s21, 1
      %p123 = por %p121, %p122
      %p124 = scmp.ne.s32.totalorder %s115, %s116
      %p125 = scmp.eq.s32.totalorder %s21, 0
      %p126 = por %p124, %p125
      %p127 = scmp.ne.s32.totalorder %s115, %s116
      %p128 = scmp.eq.s32.totalorder %s22, 1
      %p129 = por %p127, %p128
      %p131 = scmp.ne.s32.totalorder %s116, %s130
      %p132 = scmp.eq.s32.totalorder %s22, 0
      %p133 = por %p131, %p132
      %s135 = sadd.s32 %s134, 1
      %p138 = scmp.eq.s32.totalorder %s16, 1
      %p139 = scmp.ne.s32.totalorder %s134, %s136
      %p140 = scmp.eq.s32.totalorder %s16, 0
      %p141 = por %p139, %p140
      %p142 = scmp.ne.s32.totalorder %s134, %s136
      %p143 = scmp.eq.s32.totalorder %s21, 1
      %p144 = por %p142, %p143
      %p145 = scmp.ne.s32.totalorder %s136, %s137
      %p146 = scmp.eq.s32.totalorder %s21, 0
      %p147 = por %p145, %p146
      %p148 = scmp.ne.s32.totalorder %s136, %s137
      %p149 = scmp.eq.s32.totalorder %s22, 1
      %p150 = por %p148, %p149
      %p152 = scmp.ne.s32.totalorder %s137, %s151
      %p153 = scmp.eq.s32.totalorder %s22, 0
      %p154 = por %p152, %p153
      %s156 = sadd.s32 %s155, 1
      %p159 = scmp.eq.s32.totalorder %s16, 1
      %p160 = scmp.ne.s32.totalorder %s155, %s157
      %p161 = scmp.eq.s32.totalorder %s16, 0
      %p162 = por %p160, %p161
      %p163 = scmp.ne.s32.totalorder %s155, %s157
      %p164 = scmp.eq.s32.totalorder %s21, 1
      %p165 = por %p163, %p164
      %p166 = scmp.ne.s32.totalorder %s157, %s158
      %p167 = scmp.eq.s32.totalorder %s21, 0
      %p168 = por %p166, %p167
      %p169 = scmp.ne.s32.totalorder %s157, %s158
      %p170 = scmp.eq.s32.totalorder %s22, 1
      %p171 = por %p169, %p170
      %p173 = scmp.ne.s32.totalorder %s158, %s172
      %p174 = scmp.eq.s32.totalorder %s22, 0
      %p175 = por %p173, %p174
      %s177 = sadd.s32 %s176, 1
      %p180 = scmp.eq.s32.totalorder %s16, 1
      %p181 = scmp.ne.s32.totalorder %s176, %s178
      %p182 = scmp.eq.s32.totalorder %s16, 0
      %p183 = por %p181, %p182
      %p184 = scmp.ne.s32.totalorder %s176, %s178
      %p185 = scmp.eq.s32.totalorder %s21, 1
      %p186 = por %p184, %p185
      %p187 = scmp.ne.s32.totalorder %s178, %s179
      %p188 = scmp.eq.s32.totalorder %s21, 0
      %p189 = por %p187, %p188
      %p190 = scmp.ne.s32.totalorder %s178, %s179
      %p191 = scmp.eq.s32.totalorder %s22, 1
      %p192 = por %p190, %p191
      %p194 = scmp.ne.s32.totalorder %s179, %s193
      %p195 = scmp.eq.s32.totalorder %s22, 0
      %p196 = por %p194, %p195
      %s198 = sadd.s32 %s197, 1
      %p201 = scmp.eq.s32.totalorder %s16, 1
      %p202 = scmp.ne.s32.totalorder %s197, %s199
      %p203 = scmp.eq.s32.totalorder %s16, 0
      %p204 = por %p202, %p203
      %p205 = scmp.ne.s32.totalorder %s197, %s199
      %p206 = scmp.eq.s32.totalorder %s21, 1
      %p207 = por %p205, %p206
      %p208 = scmp.ne.s32.totalorder %s199, %s200
      %p209 = scmp.eq.s32.totalorder %s21, 0
      %p210 = por %p208, %p209
      %p211 = scmp.ne.s32.totalorder %s199, %s200
      %p212 = scmp.eq.s32.totalorder %s22, 1
      %p213 = por %p211, %p212
      %p215 = scmp.ne.s32.totalorder %s200, %s214
      %p216 = scmp.eq.s32.totalorder %s22, 0
      %p217 = por %p215, %p216
      %s218 = ssub.s32 %s16, %s23
      %p219 = scmp.eq.s32.totalorder %s218, 0
      %s221 = sadd.s32 %s220, 1
      %s222 = scalar_select %p219, %s220, %s221
      %p225 = pneg %p219
      %p226 = scmp.eq.s32.totalorder %s16, 1
      %p227 = por %p225, %p226
      %p228 = scmp.ne.s32.totalorder %s220, %s223
      %p229 = scmp.eq.s32.totalorder %s16, 0
      %p230 = por %p228, %p229
      %p231 = scmp.ne.s32.totalorder %s220, %s223
      %p232 = scmp.eq.s32.totalorder %s21, 1
      %p233 = por %p231, %p232
      %p234 = scmp.ne.s32.totalorder %s223, %s224
      %p235 = scmp.eq.s32.totalorder %s21, 0
      %p236 = por %p234, %p235
      %p237 = scmp.ne.s32.totalorder %s223, %s224
      %p238 = scmp.eq.s32.totalorder %s22, 1
      %p239 = por %p237, %p238
      %p241 = scmp.ne.s32.totalorder %s224, %s240
      %p242 = scmp.eq.s32.totalorder %s22, 0
      %p243 = por %p241, %p242
      %p244 = scmp.le.s32.totalorder 1, %s16
      %p245 = scmp.lt.s32.totalorder %s16, 3
      %p246 = pnand %p244, %p245
      %p247 = pneg %p246
      // Predicated region
      $region9: #{feed_forward.1} parent=5 // pred_check
        _
      $region10: #{feed_forward.1} parent=5 // pred_check_branch
        %249 = sbr.rel (%p246) target = $region12
      $region11: #{feed_forward.1} parent=5 // pred_region
        %s250 = ssub.s32 %s16, 1
        // Predicated region
        $region13: #{feed_forward.1} parent=11 // pred_check
          %p251 = pneg %p63
        $region14: #{feed_forward.1} parent=11 // pred_check_branch
          %253 = sbr.rel (%p251) target = $region16
        $region15: #{feed_forward.1} parent=11 // pred_region
          _
        $region16: #{feed_forward.1} parent=11 // pred_fallthru
          _
        // Predicated region
        $region17: #{feed_forward.1} parent=11 // pred_check
          %p254 = pneg %p84
        $region18: #{feed_forward.1} parent=11 // pred_check_branch
          %256 = sbr.rel (%p254) target = $region20
        $region19: #{feed_forward.1} parent=11 // pred_region
          _
        $region20: #{feed_forward.1} parent=11 // pred_fallthru
          _
        // Predicated region
        $region21: #{feed_forward.1} parent=11 // pred_check
          %p257 = pneg %p105
        $region22: #{feed_forward.1} parent=11 // pred_check_branch
          %259 = sbr.rel (%p257) target = $region24
        $region23: #{feed_forward.1} parent=11 // pred_region
          _
        $region24: #{feed_forward.1} parent=11 // pred_fallthru
          _
        // Predicated region
        $region25: #{feed_forward.1} parent=11 // pred_check
          %p260 = pneg %p126
        $region26: #{feed_forward.1} parent=11 // pred_check_branch
          %262 = sbr.rel (%p260) target = $region28
        $region27: #{feed_forward.1} parent=11 // pred_region
          _
        $region28: #{feed_forward.1} parent=11 // pred_fallthru
          _
        // Predicated region
        $region29: #{feed_forward.1} parent=11 // pred_check
          %p263 = pneg %p147
        $region30: #{feed_forward.1} parent=11 // pred_check_branch
          %265 = sbr.rel (%p263) target = $region32
        $region31: #{feed_forward.1} parent=11 // pred_region
          _
        $region32: #{feed_forward.1} parent=11 // pred_fallthru
          _
        // Predicated region
        $region33: #{feed_forward.1} parent=11 // pred_check
          %p266 = pneg %p168
        $region34: #{feed_forward.1} parent=11 // pred_check_branch
          %268 = sbr.rel (%p266) target = $region36
        $region35: #{feed_forward.1} parent=11 // pred_region
          _
        $region36: #{feed_forward.1} parent=11 // pred_fallthru
          _
        // Predicated region
        $region37: #{feed_forward.1} parent=11 // pred_check
          %p269 = pneg %p189
        $region38: #{feed_forward.1} parent=11 // pred_check_branch
          %271 = sbr.rel (%p269) target = $region40
        $region39: #{feed_forward.1} parent=11 // pred_region
          _
        $region40: #{feed_forward.1} parent=11 // pred_fallthru
          _
        // Predicated region
        $region41: #{feed_forward.1} parent=11 // pred_check
          %p272 = pneg %p210
        $region42: #{feed_forward.1} parent=11 // pred_check_branch
          %274 = sbr.rel (%p272) target = $region44
        $region43: #{feed_forward.1} parent=11 // pred_region
          %276 = vsyncadd [#allocation3], 0
          %s278 = sshll.u32 %s8, 4
          %s279 = int_to_ptr.vmem [resolvable:$true] %s278
          %281 = dma.vmem_to_smem %s279, 16, [#allocation2], [#allocation3]
        $region44: #{feed_forward.1} parent=11 // pred_fallthru
          _
      $region12: #{feed_forward.1} parent=5 // pred_fallthru
        _
      %p282 = scmp.lt.s32.totalorder %s16, 2
      // Predicated region
      $region45: #{feed_forward.1} parent=5 // pred_check
        %p283 = pneg %p282
      $region46: #{feed_forward.1} parent=5 // pred_check_branch
        %285 = sbr.rel (%p283) target = $region48
      $region47: #{feed_forward.1} parent=5 // pred_region
        // Predicated region
        $region49: #{feed_forward.1} parent=47 // pred_check
          %p286 = pneg %p36
        $region50: #{feed_forward.1} parent=47 // pred_check_branch
          %288 = sbr.rel (%p286) target = $region52
        $region51: #{feed_forward.1} parent=47 // pred_region
          %p289 = scmp.lt.s32.totalorder %s16, 1
          %s290 = scalar_select %p289, %s16, 1
          %s291 = smul.addr %s290, 2
          %s292 = smul.addr %s291, 4
          %s293 = scalar_lea.vmem %s0, %s292
        $region52: #{feed_forward.1} parent=47 // pred_fallthru
          _
      $region48: #{feed_forward.1} parent=5 // pred_fallthru
        _
      %p294 = scmp.le.s32.totalorder 1, %s16
      %p295 = scmp.lt.s32.totalorder %s16, 3
      %p296 = pnand %p294, %p295
      %p297 = pneg %p296
      // Predicated region
      $region53: #{feed_forward.1} parent=5 // pred_check
        _
      $region54: #{feed_forward.1} parent=5 // pred_check_branch
        %299 = sbr.rel (%p296) target = $region56
      $region55: #{feed_forward.1} parent=5 // pred_region
        %s300 = ssub.s32 %s16, 1
        // Predicated region
        $region57: #{feed_forward.1} parent=55 // pred_check
          %p301 = pneg %p210
        $region58: #{feed_forward.1} parent=55 // pred_check_branch
          %303 = sbr.rel (%p301) target = $region60
        $region59: #{feed_forward.1} parent=55 // pred_region
          %305 = dma.done [#allocation3], 16
        $region60: #{feed_forward.1} parent=55 // pred_fallthru
          _
        %306 = sfence
        %p307 = scmp.lt.s32.totalorder %s21, 1
        %s308 = scalar_select %p307, %s21, 1
        %s309 = smul.addr %s308, 2
        %s310 = smul.addr %s309, 4
        %s311 = scalar_lea.vmem %s0, %s310
        %p312 = pneg %p42
        %p313 = pneg %p39
        %p314 = pneg %p63
        %p315 = pneg %p60
        %p316 = pneg %p84
        %p317 = pneg %p81
        %p318 = pneg %p105
        %p319 = pneg %p102
        %p320 = pneg %p126
        %p321 = pneg %p123
        %p322 = pneg %p147
        %p323 = pneg %p144
        %p324 = pneg %p168
        %p325 = pneg %p165
        %p326 = pneg %p189
        %p327 = pneg %p186
        %p328 = pneg %p210
        %p329 = pneg %p207
        %p330 = pneg %p236
        %p331 = pneg %p233
        %p332 = scmp.lt.s32.totalorder %s21, 1
        %s333 = scalar_select %p332, %s21, 1
        %s334 = smul.addr %s333, 2
        %s335 = smul.addr %s334, 8
        %s336 = scalar_lea.vmem %s9, %s335
        %p337 = scmp.lt.s32.totalorder %s21, 1
        %s338 = scalar_select %p337, %s21, 1
        %s339 = smul.addr %s338, 2
        %s340 = smul.addr %s339, 4
        %s341 = scalar_lea.vmem %s0, %s340
        %p342 = scmp.lt.s32.totalorder %s21, 1
        %s343 = scalar_select %p342, %s21, 1
        %s344 = smul.addr %s343, 2
        %s345 = smul.addr %s344, 8
        %s346 = scalar_lea.vmem %s9, %s345
        %v348 = vld [vmem:[%s341] sm:$0xff]
        %v349 = vld [vmem:[%s1] sm:$0xf]
        %v350 = vld [vmem:[%s1 + $0x4] sm:$0xf]
        %v353 = vunpack.c.l.b16 %v349
        %v354 = vunpack.c.l.b16 %v350
        %v355 = vpack.c.b16 %v354, %v353
        %v357 = vunpack.c.l.b16 %v348
        %v358 = vunpack.c.h.b16 %v348
        %v359 = vpack.c.b16 %v357, %v357
        %v360 = vpack.c.b16 %v358, %v358
        %vm361 = vcmask 64512
        %v363 = vsel %vm361, %v355, 0
        %vm365 = vcmask 1043456
        %v367 = vsel %vm365, %v359, 0
        %v370 = vsel %vm365, %v360, 0
        %372 = vmatpush.bf16.msra.mxu0 0
        %373 = vmatpush.bf16.msra.mxu0 0
        %374 = vmatpush.bf16.msra.mxu0 0
        %375 = vmatpush.bf16.msra.mxu0 0
        %376 = vmatpush.bf16.msra.mxu0 0
        %377 = vmatpush.bf16.msra.mxu0 0
        %378 = vmatpush.bf16.msra.mxu0 0
        %379 = vmatpush.bf16.msra.mxu0 %v367
        %380 = vmatmul.bf16.gmra.mxu0 %v363
        %v381 = vpop.f32.mrf.mxu0
        %v382 = vadd.f32 0.0, %v381
        %v383 = vpop.f32.mrf.mxu0
        %v384 = vadd.f32 0.0, %v383
        %385 = vdwg.mxu0
        %386 = vmatpush.bf16.msra.mxu0 0
        %387 = vmatpush.bf16.msra.mxu0 0
        %388 = vmatpush.bf16.msra.mxu0 0
        %389 = vmatpush.bf16.msra.mxu0 0
        %390 = vmatpush.bf16.msra.mxu0 0
        %391 = vmatpush.bf16.msra.mxu0 0
        %392 = vmatpush.bf16.msra.mxu0 0
        %393 = vmatpush.bf16.msra.mxu0 %v370
        %394 = vmatmul.bf16.gmra.mxu0 %v363
        %v395 = vpop.f32.mrf.mxu0
        %v396 = vadd.f32 0.0, %v395
        %v397 = vpop.f32.mrf.mxu0
        %v398 = vadd.f32 0.0, %v397
        %399 = vdwg.mxu0
        %v400 = vld [vmem:[%s2] sm:$0xf]
        %v401 = vld [vmem:[%s2 + $0x4] sm:$0xf]
        %v404 = vunpack.c.l.b16 %v400
        %v405 = vunpack.c.l.b16 %v401
        %v406 = vpack.c.b16 %v405, %v404
        %v408 = vsel %vm361, %v406, 0
        %410 = vmatpush.bf16.msra.mxu0 0
        %411 = vmatpush.bf16.msra.mxu0 0
        %412 = vmatpush.bf16.msra.mxu0 0
        %413 = vmatpush.bf16.msra.mxu0 0
        %414 = vmatpush.bf16.msra.mxu0 0
        %415 = vmatpush.bf16.msra.mxu0 0
        %416 = vmatpush.bf16.msra.mxu0 0
        %417 = vmatpush.bf16.msra.mxu0 %v367
        %418 = vmatmul.bf16.gmra.mxu0 %v408
        %v419 = vpop.f32.mrf.mxu0
        %v420 = vadd.f32 0.0, %v419
        %v421 = vpop.f32.mrf.mxu0
        %v422 = vadd.f32 0.0, %v421
        %423 = vdwg.mxu0
        %424 = vmatpush.bf16.msra.mxu0 0
        %425 = vmatpush.bf16.msra.mxu0 0
        %426 = vmatpush.bf16.msra.mxu0 0
        %427 = vmatpush.bf16.msra.mxu0 0
        %428 = vmatpush.bf16.msra.mxu0 0
        %429 = vmatpush.bf16.msra.mxu0 0
        %430 = vmatpush.bf16.msra.mxu0 0
        %431 = vmatpush.bf16.msra.mxu0 %v370
        %432 = vmatmul.bf16.gmra.mxu0 %v408
        %v433 = vpop.f32.mrf.mxu0
        %v434 = vadd.f32 0.0, %v433
        %v435 = vpop.f32.mrf.mxu0
        %v436 = vadd.f32 0.0, %v435
        %437 = vdwg.mxu0
        %v438 = vld [vmem:[%s3] sm:$0xff]
        %v439 = vld [vmem:[%s3 + $0x8] sm:$0xff]
        %441 = vset.pattern.permute.xlu0 4
        %442 = vperm.xlu0 %441, %v438
        %v443 = vpop.permute.xlu0 %442
        %446 = vset.pattern.permute.xlu0 4
        %447 = vperm.xlu0 %446, %v439
        %v448 = vpop.permute.xlu0 %447
        %v450 = vmul.f32 %v382, %v443
        %v451 = vmul.f32 %v396, %v443
        %v452 = vmul.f32 %v384, %v448
        %v453 = vmul.f32 %v398, %v448
        %454 = vrot.lane.b32.xlu0 %v382, 17
        %v455 = vpop.permute.xlu0 %454
        %456 = vrot.lane.b32.xlu0 %v384, 17
        %v457 = vpop.permute.xlu0 %456
        %458 = vrot.lane.b32.xlu0 %v396, 17
        %v459 = vpop.permute.xlu0 %458
        %460 = vrot.lane.b32.xlu0 %v398, 17
        %v461 = vpop.permute.xlu0 %460
        %v462 = vlaneseq
        %v463 = vand.u32 %v462, 127
        %vm464 = vcmp.lt.s32.totalorder %v463, 17
        %v465 = vsel %vm464, %v455, %v459
        %v466 = vsel %vm464, %v457, %v461
        %v467 = vsel %vm464, %v459, %v455
        %v468 = vsel %vm464, %v461, %v457
        %s469 = scalar_lea.vmem %s5, 6
        %v470 = vld [vmem:[%s469] ss:$8 sm:$0x3]
        %v472 = vperm.slane %v470, 0
        %v473 = vperm.slane %v470, 1
        %v476 = vmul.f32 %v467, %v472
        %v477 = vmul.f32 %v465, %v473
        %v478 = vmul.f32 %v468, %v472
        %v479 = vmul.f32 %v466, %v473
        %480 = vset.pattern.permute.xlu0 0
        %481 = vperm.xlu0 %480, %v438
        %v482 = vpop.permute.xlu0 %481
        %484 = vset.pattern.permute.xlu0 0
        %485 = vperm.xlu0 %484, %v439
        %v486 = vpop.permute.xlu0 %485
        %v488 = vmul.f32 %v476, %v482
        %v489 = vmul.f32 %v477, %v482
        %v490 = vmul.f32 %v478, %v486
        %v491 = vmul.f32 %v479, %v486
        %v492 = vadd.f32 %v450, %v488
        %v493 = vadd.f32 %v451, %v489
        %v494 = vadd.f32 %v452, %v490
        %v495 = vadd.f32 %v453, %v491
        %496 = vrot.lane.b32.xlu0 %v382, 16
        %v497 = vpop.permute.xlu0 %496
        %498 = vrot.lane.b32.xlu0 %v384, 16
        %v499 = vpop.permute.xlu0 %498
        %500 = vrot.lane.b32.xlu0 %v396, 16
        %v501 = vpop.permute.xlu0 %500
        %502 = vrot.lane.b32.xlu0 %v398, 16
        %v503 = vpop.permute.xlu0 %502
        %vm504 = vcmp.lt.s32.totalorder %v463, 16
        %v505 = vsel %vm504, %v497, %v501
        %v506 = vsel %vm504, %v499, %v503
        %v507 = vsel %vm504, %v501, %v497
        %v508 = vsel %vm504, %v503, %v499
        %s509 = scalar_lea.vmem %s5, 7
        %v510 = vld [vmem:[%s509] ss:$8 sm:$0x3]
        %v512 = vperm.slane %v510, 0
        %v513 = vperm.slane %v510, 1
        %v516 = vmul.f32 %v507, %v512
        %v517 = vmul.f32 %v505, %v513
        %v518 = vmul.f32 %v508, %v512
        %v519 = vmul.f32 %v506, %v513
        %520 = vset.pattern.permute.xlu0 1
        %521 = vperm.xlu0 %520, %v438
        %v522 = vpop.permute.xlu0 %521
        %524 = vset.pattern.permute.xlu0 1
        %525 = vperm.xlu0 %524, %v439
        %v526 = vpop.permute.xlu0 %525
        %v528 = vmul.f32 %v516, %v522
        %v529 = vmul.f32 %v517, %v522
        %v530 = vmul.f32 %v518, %v526
        %v531 = vmul.f32 %v519, %v526
        %v532 = vadd.f32 %v492, %v528
        %v533 = vadd.f32 %v493, %v529
        %v534 = vadd.f32 %v494, %v530
        %v535 = vadd.f32 %v495, %v531
        %536 = vrot.lane.b32.xlu0 %v382, 15
        %v537 = vpop.permute.xlu0 %536
        %538 = vrot.lane.b32.xlu0 %v384, 15
        %v539 = vpop.permute.xlu0 %538
        %540 = vrot.lane.b32.xlu0 %v396, 15
        %v541 = vpop.permute.xlu0 %540
        %542 = vrot.lane.b32.xlu0 %v398, 15
        %v543 = vpop.permute.xlu0 %542
        %vm544 = vcmp.lt.s32.totalorder %v463, 15
        %v545 = vsel %vm544, %v537, %v541
        %v546 = vsel %vm544, %v539, %v543
        %v547 = vsel %vm544, %v541, %v537
        %v548 = vsel %vm544, %v543, %v539
        %s549 = scalar_lea.vmem %s5, 16
        %v550 = vld [vmem:[%s549] ss:$8 sm:$0x3]
        %v552 = vperm.slane %v550, 0
        %v553 = vperm.slane %v550, 1
        %v556 = vmul.f32 %v547, %v552
        %v557 = vmul.f32 %v545, %v553
        %v558 = vmul.f32 %v548, %v552
        %v559 = vmul.f32 %v546, %v553
        %560 = vset.pattern.permute.xlu0 2
        %561 = vperm.xlu0 %560, %v438
        %v562 = vpop.permute.xlu0 %561
        %564 = vset.pattern.permute.xlu0 2
        %565 = vperm.xlu0 %564, %v439
        %v566 = vpop.permute.xlu0 %565
        %v568 = vmul.f32 %v556, %v562
        %v569 = vmul.f32 %v557, %v562
        %v570 = vmul.f32 %v558, %v566
        %v571 = vmul.f32 %v559, %v566
        %v572 = vadd.f32 %v532, %v568
        %v573 = vadd.f32 %v533, %v569
        %v574 = vadd.f32 %v534, %v570
        %v575 = vadd.f32 %v535, %v571
        %576 = vrot.lane.b32.xlu0 %v382, 1
        %v577 = vpop.permute.xlu0 %576
        %578 = vrot.lane.b32.xlu0 %v384, 1
        %v579 = vpop.permute.xlu0 %578
        %580 = vrot.lane.b32.xlu0 %v396, 1
        %v581 = vpop.permute.xlu0 %580
        %582 = vrot.lane.b32.xlu0 %v398, 1
        %v583 = vpop.permute.xlu0 %582
        %vm584 = vcmp.lt.s32.totalorder %v463, 1
        %v585 = vsel %vm584, %v577, %v581
        %v586 = vsel %vm584, %v579, %v583
        %v587 = vsel %vm584, %v581, %v577
        %v588 = vsel %vm584, %v583, %v579
        %s589 = scalar_lea.vmem %s5, 19
        %v590 = vld [vmem:[%s589] ss:$8 sm:$0x3]
        %v592 = vperm.slane %v590, 0
        %v593 = vperm.slane %v590, 1
        %v596 = vmul.f32 %v587, %v592
        %v597 = vmul.f32 %v585, %v593
        %v598 = vmul.f32 %v588, %v592
        %v599 = vmul.f32 %v586, %v593
        %600 = vset.pattern.permute.xlu0 3
        %601 = vperm.xlu0 %600, %v438
        %v602 = vpop.permute.xlu0 %601
        %604 = vset.pattern.permute.xlu0 3
        %605 = vperm.xlu0 %604, %v439
        %v606 = vpop.permute.xlu0 %605
        %v608 = vmul.f32 %v596, %v602
        %v609 = vmul.f32 %v597, %v602
        %v610 = vmul.f32 %v598, %v606
        %v611 = vmul.f32 %v599, %v606
        %v612 = vadd.f32 %v572, %v608
        %v613 = vadd.f32 %v573, %v609
        %v614 = vadd.f32 %v574, %v610
        %v615 = vadd.f32 %v575, %v611
        %616 = vrot.lane.b32.xlu0 %v382, 127
        %v617 = vpop.permute.xlu0 %616
        %618 = vrot.lane.b32.xlu0 %v384, 127
        %v619 = vpop.permute.xlu0 %618
        %620 = vrot.lane.b32.xlu0 %v396, 127
        %v621 = vpop.permute.xlu0 %620
        %622 = vrot.lane.b32.xlu0 %v398, 127
        %v623 = vpop.permute.xlu0 %622
        %vm624 = vcmp.lt.s32.totalorder %v463, 127
        %v625 = vsel %vm624, %v617, %v621
        %v626 = vsel %vm624, %v619, %v623
        %v627 = vsel %vm624, %v621, %v617
        %v628 = vsel %vm624, %v623, %v619
        %s629 = scalar_lea.vmem %s5, 21
        %v630 = vld [vmem:[%s629] ss:$8 sm:$0x3]
        %v632 = vperm.slane %v630, 0
        %v633 = vperm.slane %v630, 1
        %v636 = vmul.f32 %v625, %v632
        %v637 = vmul.f32 %v627, %v633
        %v638 = vmul.f32 %v626, %v632
        %v639 = vmul.f32 %v628, %v633
        %640 = vset.pattern.permute.xlu0 5
        %641 = vperm.xlu0 %640, %v438
        %v642 = vpop.permute.xlu0 %641
        %644 = vset.pattern.permute.xlu0 5
        %645 = vperm.xlu0 %644, %v439
        %v646 = vpop.permute.xlu0 %645
        %v648 = vmul.f32 %v636, %v642
        %v649 = vmul.f32 %v637, %v642
        %v650 = vmul.f32 %v638, %v646
        %v651 = vmul.f32 %v639, %v646
        %v652 = vadd.f32 %v612, %v648
        %v653 = vadd.f32 %v613, %v649
        %v654 = vadd.f32 %v614, %v650
        %v655 = vadd.f32 %v615, %v651
        %656 = vrot.lane.b32.xlu0 %v382, 113
        %v657 = vpop.permute.xlu0 %656
        %658 = vrot.lane.b32.xlu0 %v384, 113
        %v659 = vpop.permute.xlu0 %658
        %660 = vrot.lane.b32.xlu0 %v396, 113
        %v661 = vpop.permute.xlu0 %660
        %662 = vrot.lane.b32.xlu0 %v398, 113
        %v663 = vpop.permute.xlu0 %662
        %vm664 = vcmp.lt.s32.totalorder %v463, 113
        %v665 = vsel %vm664, %v657, %v661
        %v666 = vsel %vm664, %v659, %v663
        %v667 = vsel %vm664, %v661, %v657
        %v668 = vsel %vm664, %v663, %v659
        %s669 = scalar_lea.vmem %s5, 32
        %v670 = vld [vmem:[%s669] ss:$8 sm:$0x3]
        %v672 = vperm.slane %v670, 0
        %v673 = vperm.slane %v670, 1
        %v676 = vmul.f32 %v665, %v672
        %v677 = vmul.f32 %v667, %v673
        %v678 = vmul.f32 %v666, %v672
        %v679 = vmul.f32 %v668, %v673
        %680 = vset.pattern.permute.xlu0 6
        %681 = vperm.xlu0 %680, %v438
        %v682 = vpop.permute.xlu0 %681
        %684 = vset.pattern.permute.xlu0 6
        %685 = vperm.xlu0 %684, %v439
        %v686 = vpop.permute.xlu0 %685
        %v688 = vmul.f32 %v676, %v682
        %v689 = vmul.f32 %v677, %v682
        %v690 = vmul.f32 %v678, %v686
        %v691 = vmul.f32 %v679, %v686
        %v692 = vadd.f32 %v652, %v688
        %v693 = vadd.f32 %v653, %v689
        %v694 = vadd.f32 %v654, %v690
        %v695 = vadd.f32 %v655, %v691
        %696 = vrot.lane.b32.xlu0 %v382, 112
        %v697 = vpop.permute.xlu0 %696
        %698 = vrot.lane.b32.xlu0 %v384, 112
        %v699 = vpop.permute.xlu0 %698
        %700 = vrot.lane.b32.xlu0 %v396, 112
        %v701 = vpop.permute.xlu0 %700
        %702 = vrot.lane.b32.xlu0 %v398, 112
        %v703 = vpop.permute.xlu0 %702
        %vm704 = vcmp.lt.s32.totalorder %v463, 112
        %v705 = vsel %vm704, %v697, %v701
        %v706 = vsel %vm704, %v699, %v703
        %v707 = vsel %vm704, %v701, %v697
        %v708 = vsel %vm704, %v703, %v699
        %s709 = scalar_lea.vmem %s5, 33
        %v710 = vld [vmem:[%s709] ss:$8 sm:$0x3]
        %v712 = vperm.slane %v710, 0
        %v713 = vperm.slane %v710, 1
        %v716 = vmul.f32 %v705, %v712
        %v717 = vmul.f32 %v707, %v713
        %v718 = vmul.f32 %v706, %v712
        %v719 = vmul.f32 %v708, %v713
        %720 = vset.pattern.permute.xlu0 7
        %721 = vperm.xlu0 %720, %v438
        %v722 = vpop.permute.xlu0 %721
        %724 = vset.pattern.permute.xlu0 7
        %725 = vperm.xlu0 %724, %v439
        %v726 = vpop.permute.xlu0 %725
        %v728 = vmul.f32 %v716, %v722
        %v729 = vmul.f32 %v717, %v722
        %v730 = vmul.f32 %v718, %v726
        %v731 = vmul.f32 %v719, %v726
        %v732 = vadd.f32 %v692, %v728
        %v733 = vadd.f32 %v693, %v729
        %v734 = vadd.f32 %v694, %v730
        %v735 = vadd.f32 %v695, %v731
        %736 = vrot.lane.b32.xlu0 %v382, 111
        %v737 = vpop.permute.xlu0 %736
        %738 = vrot.lane.b32.xlu0 %v384, 111
        %v739 = vpop.permute.xlu0 %738
        %740 = vrot.lane.b32.xlu0 %v396, 111
        %v741 = vpop.permute.xlu0 %740
        %742 = vrot.lane.b32.xlu0 %v398, 111
        %v743 = vpop.permute.xlu0 %742
        %vm744 = vcmp.lt.s32.totalorder %v463, 111
        %v745 = vsel %vm744, %v737, %v741
        %v746 = vsel %vm744, %v739, %v743
        %v747 = vsel %vm744, %v741, %v737
        %v748 = vsel %vm744, %v743, %v739
        %s749 = scalar_lea.vmem %s5, 34
        %v750 = vld [vmem:[%s749] ss:$8 sm:$0x3]
        %v752 = vperm.slane %v750, 0
        %v753 = vperm.slane %v750, 1
        %v756 = vmul.f32 %v745, %v752
        %v757 = vmul.f32 %v747, %v753
        %v758 = vmul.f32 %v746, %v752
        %v759 = vmul.f32 %v748, %v753
        %760 = vset.pattern.permute.xlu0 8
        %761 = vperm.xlu0 %760, %v438
        %v762 = vpop.permute.xlu0 %761
        %764 = vset.pattern.permute.xlu0 8
        %765 = vperm.xlu0 %764, %v439
        %v766 = vpop.permute.xlu0 %765
        %v768 = vmul.f32 %v756, %v762
        %v769 = vmul.f32 %v757, %v762
        %v770 = vmul.f32 %v758, %v766
        %v771 = vmul.f32 %v759, %v766
        %v772 = vadd.f32 %v732, %v768
        %v773 = vadd.f32 %v733, %v769
        %v774 = vadd.f32 %v734, %v770
        %v775 = vadd.f32 %v735, %v771
        %v776 = vmax.f32 %v772, 0.0
        %v777 = vmax.f32 %v773, 0.0
        %v778 = vmax.f32 %v774, 0.0
        %v779 = vmax.f32 %v775, 0.0
        %v780 = vld [vmem:[%s4] sm:$0xff]
        %v781 = vld [vmem:[%s4 + $0x8] sm:$0xff]
        %783 = vset.pattern.permute.xlu0 12
        %784 = vperm.xlu0 %783, %v780
        %v785 = vpop.permute.xlu0 %784
        %788 = vset.pattern.permute.xlu0 12
        %789 = vperm.xlu0 %788, %v781
        %v790 = vpop.permute.xlu0 %789
        %v792 = vmul.f32 %v420, %v785
        %v793 = vmul.f32 %v434, %v785
        %v794 = vmul.f32 %v422, %v790
        %v795 = vmul.f32 %v436, %v790
        %796 = vrot.lane.b32.xlu0 %v420, 34
        %v797 = vpop.permute.xlu0 %796
        %798 = vrot.lane.b32.xlu0 %v422, 34
        %v799 = vpop.permute.xlu0 %798
        %800 = vrot.lane.b32.xlu0 %v434, 34
        %v801 = vpop.permute.xlu0 %800
        %802 = vrot.lane.b32.xlu0 %v436, 34
        %v803 = vpop.permute.xlu0 %802
        %vm804 = vcmp.lt.s32.totalorder %v463, 34
        %v805 = vsel %vm804, %v797, %v801
        %v806 = vsel %vm804, %v799, %v803
        %v807 = vsel %vm804, %v801, %v797
        %v808 = vsel %vm804, %v803, %v799
        %v809 = vld [vmem:[%s5] ss:$8 sm:$0x3]
        %v811 = vperm.slane %v809, 0
        %v812 = vperm.slane %v809, 1
        %v815 = vmul.f32 %v807, %v811
        %v816 = vmul.f32 %v805, %v812
        %v817 = vmul.f32 %v808, %v811
        %v818 = vmul.f32 %v806, %v812
        %819 = vset.pattern.permute.xlu0 0
        %820 = vperm.xlu0 %819, %v780
        %v821 = vpop.permute.xlu0 %820
        %823 = vset.pattern.permute.xlu0 0
        %824 = vperm.xlu0 %823, %v781
        %v825 = vpop.permute.xlu0 %824
        %v827 = vmul.f32 %v815, %v821
        %v828 = vmul.f32 %v816, %v821
        %v829 = vmul.f32 %v817, %v825
        %v830 = vmul.f32 %v818, %v825
        %v831 = vadd.f32 %v792, %v827
        %v832 = vadd.f32 %v793, %v828
        %v833 = vadd.f32 %v794, %v829
        %v834 = vadd.f32 %v795, %v830
        %835 = vrot.lane.b32.xlu0 %v420, 33
        %v836 = vpop.permute.xlu0 %835
        %837 = vrot.lane.b32.xlu0 %v422, 33
        %v838 = vpop.permute.xlu0 %837
        %839 = vrot.lane.b32.xlu0 %v434, 33
        %v840 = vpop.permute.xlu0 %839
        %841 = vrot.lane.b32.xlu0 %v436, 33
        %v842 = vpop.permute.xlu0 %841
        %vm843 = vcmp.lt.s32.totalorder %v463, 33
        %v844 = vsel %vm843, %v836, %v840
        %v845 = vsel %vm843, %v838, %v842
        %v846 = vsel %vm843, %v840, %v836
        %v847 = vsel %vm843, %v842, %v838
        %s848 = scalar_lea.vmem %s5, 1
        %v849 = vld [vmem:[%s848] ss:$8 sm:$0x3]
        %v851 = vperm.slane %v849, 0
        %v852 = vperm.slane %v849, 1
        %v855 = vmul.f32 %v846, %v851
        %v856 = vmul.f32 %v844, %v852
        %v857 = vmul.f32 %v847, %v851
        %v858 = vmul.f32 %v845, %v852
        %859 = vset.pattern.permute.xlu0 1
        %860 = vperm.xlu0 %859, %v780
        %v861 = vpop.permute.xlu0 %860
        %863 = vset.pattern.permute.xlu0 1
        %864 = vperm.xlu0 %863, %v781
        %v865 = vpop.permute.xlu0 %864
        %v867 = vmul.f32 %v855, %v861
        %v868 = vmul.f32 %v856, %v861
        %v869 = vmul.f32 %v857, %v865
        %v870 = vmul.f32 %v858, %v865
        %v871 = vadd.f32 %v831, %v867
        %v872 = vadd.f32 %v832, %v868
        %v873 = vadd.f32 %v833, %v869
        %v874 = vadd.f32 %v834, %v870
        %875 = vrot.lane.b32.xlu0 %v420, 32
        %v876 = vpop.permute.xlu0 %875
        %877 = vrot.lane.b32.xlu0 %v422, 32
        %v878 = vpop.permute.xlu0 %877
        %879 = vrot.lane.b32.xlu0 %v434, 32
        %v880 = vpop.permute.xlu0 %879
        %881 = vrot.lane.b32.xlu0 %v436, 32
        %v882 = vpop.permute.xlu0 %881
        %vm883 = vcmp.lt.s32.totalorder %v463, 32
        %v884 = vsel %vm883, %v876, %v880
        %v885 = vsel %vm883, %v878, %v882
        %v886 = vsel %vm883, %v880, %v876
        %v887 = vsel %vm883, %v882, %v878
        %s888 = scalar_lea.vmem %s5, 2
        %v889 = vld [vmem:[%s888] ss:$8 sm:$0x3]
        %v891 = vperm.slane %v889, 0
        %v892 = vperm.slane %v889, 1
        %v895 = vmul.f32 %v886, %v891
        %v896 = vmul.f32 %v884, %v892
        %v897 = vmul.f32 %v887, %v891
        %v898 = vmul.f32 %v885, %v892
        %899 = vset.pattern.permute.xlu0 2
        %900 = vperm.xlu0 %899, %v780
        %v901 = vpop.permute.xlu0 %900
        %903 = vset.pattern.permute.xlu0 2
        %904 = vperm.xlu0 %903, %v781
        %v905 = vpop.permute.xlu0 %904
        %v907 = vmul.f32 %v895, %v901
        %v908 = vmul.f32 %v896, %v901
        %v909 = vmul.f32 %v897, %v905
        %v910 = vmul.f32 %v898, %v905
        %v911 = vadd.f32 %v871, %v907
        %v912 = vadd.f32 %v872, %v908
        %v913 = vadd.f32 %v873, %v909
        %v914 = vadd.f32 %v874, %v910
        %915 = vrot.lane.b32.xlu0 %v420, 31
        %v916 = vpop.permute.xlu0 %915
        %917 = vrot.lane.b32.xlu0 %v422, 31
        %v918 = vpop.permute.xlu0 %917
        %919 = vrot.lane.b32.xlu0 %v434, 31
        %v920 = vpop.permute.xlu0 %919
        %921 = vrot.lane.b32.xlu0 %v436, 31
        %v922 = vpop.permute.xlu0 %921
        %vm923 = vcmp.lt.s32.totalorder %v463, 31
        %v924 = vsel %vm923, %v916, %v920
        %v925 = vsel %vm923, %v918, %v922
        %v926 = vsel %vm923, %v920, %v916
        %v927 = vsel %vm923, %v922, %v918
        %s928 = scalar_lea.vmem %s5, 3
        %v929 = vld [vmem:[%s928] ss:$8 sm:$0x3]
        %v931 = vperm.slane %v929, 0
        %v932 = vperm.slane %v929, 1
        %v935 = vmul.f32 %v926, %v931
        %v936 = vmul.f32 %v924, %v932
        %v937 = vmul.f32 %v927, %v931
        %v938 = vmul.f32 %v925, %v932
        %939 = vset.pattern.permute.xlu0 3
        %940 = vperm.xlu0 %939, %v780
        %v941 = vpop.permute.xlu0 %940
        %943 = vset.pattern.permute.xlu0 3
        %944 = vperm.xlu0 %943, %v781
        %v945 = vpop.permute.xlu0 %944
        %v947 = vmul.f32 %v935, %v941
        %v948 = vmul.f32 %v936, %v941
        %v949 = vmul.f32 %v937, %v945
        %v950 = vmul.f32 %v938, %v945
        %v951 = vadd.f32 %v911, %v947
        %v952 = vadd.f32 %v912, %v948
        %v953 = vadd.f32 %v913, %v949
        %v954 = vadd.f32 %v914, %v950
        %955 = vrot.lane.b32.xlu0 %v420, 30
        %v956 = vpop.permute.xlu0 %955
        %957 = vrot.lane.b32.xlu0 %v422, 30
        %v958 = vpop.permute.xlu0 %957
        %959 = vrot.lane.b32.xlu0 %v434, 30
        %v960 = vpop.permute.xlu0 %959
        %961 = vrot.lane.b32.xlu0 %v436, 30
        %v962 = vpop.permute.xlu0 %961
        %vm963 = vcmp.lt.s32.totalorder %v463, 30
        %v964 = vsel %vm963, %v956, %v960
        %v965 = vsel %vm963, %v958, %v962
        %v966 = vsel %vm963, %v960, %v956
        %v967 = vsel %vm963, %v962, %v958
        %s968 = scalar_lea.vmem %s5, 4
        %v969 = vld [vmem:[%s968] ss:$8 sm:$0x3]
        %v971 = vperm.slane %v969, 0
        %v972 = vperm.slane %v969, 1
        %v975 = vmul.f32 %v966, %v971
        %v976 = vmul.f32 %v964, %v972
        %v977 = vmul.f32 %v967, %v971
        %v978 = vmul.f32 %v965, %v972
        %979 = vset.pattern.permute.xlu0 4
        %980 = vperm.xlu0 %979, %v780
        %v981 = vpop.permute.xlu0 %980
        %983 = vset.pattern.permute.xlu0 4
        %984 = vperm.xlu0 %983, %v781
        %v985 = vpop.permute.xlu0 %984
        %v987 = vmul.f32 %v975, %v981
        %v988 = vmul.f32 %v976, %v981
        %v989 = vmul.f32 %v977, %v985
        %v990 = vmul.f32 %v978, %v985
        %v991 = vadd.f32 %v951, %v987
        %v992 = vadd.f32 %v952, %v988
        %v993 = vadd.f32 %v953, %v989
        %v994 = vadd.f32 %v954, %v990
        %995 = vrot.lane.b32.xlu0 %v420, 18
        %v996 = vpop.permute.xlu0 %995
        %997 = vrot.lane.b32.xlu0 %v422, 18
        %v998 = vpop.permute.xlu0 %997
        %999 = vrot.lane.b32.xlu0 %v434, 18
        %v1000 = vpop.permute.xlu0 %999
        %1001 = vrot.lane.b32.xlu0 %v436, 18
        %v1002 = vpop.permute.xlu0 %1001
        %vm1003 = vcmp.lt.s32.totalorder %v463, 18
        %v1004 = vsel %vm1003, %v996, %v1000
        %v1005 = vsel %vm1003, %v998, %v1002
        %v1006 = vsel %vm1003, %v1000, %v996
        %v1007 = vsel %vm1003, %v1002, %v998
        %s1008 = scalar_lea.vmem %s5, 5
        %v1009 = vld [vmem:[%s1008] ss:$8 sm:$0x3]
        %v1011 = vperm.slane %v1009, 0
        %v1012 = vperm.slane %v1009, 1
        %v1015 = vmul.f32 %v1006, %v1011
        %v1016 = vmul.f32 %v1004, %v1012
        %v1017 = vmul.f32 %v1007, %v1011
        %v1018 = vmul.f32 %v1005, %v1012
        %1019 = vset.pattern.permute.xlu0 5
        %1020 = vperm.xlu0 %1019, %v780
        %v1021 = vpop.permute.xlu0 %1020
        %1023 = vset.pattern.permute.xlu0 5
        %1024 = vperm.xlu0 %1023, %v781
        %v1025 = vpop.permute.xlu0 %1024
        %v1027 = vmul.f32 %v1015, %v1021
        %v1028 = vmul.f32 %v1016, %v1021
        %v1029 = vmul.f32 %v1017, %v1025
        %v1030 = vmul.f32 %v1018, %v1025
        %v1031 = vadd.f32 %v991, %v1027
        %v1032 = vadd.f32 %v992, %v1028
        %v1033 = vadd.f32 %v993, %v1029
        %v1034 = vadd.f32 %v994, %v1030
        %1035 = vrot.lane.b32.xlu0 %v420, 17
        %v1036 = vpop.permute.xlu0 %1035
        %1037 = vrot.lane.b32.xlu0 %v422, 17
        %v1038 = vpop.permute.xlu0 %1037
        %1039 = vrot.lane.b32.xlu0 %v434, 17
        %v1040 = vpop.permute.xlu0 %1039
        %1041 = vrot.lane.b32.xlu0 %v436, 17
        %v1042 = vpop.permute.xlu0 %1041
        %v1043 = vsel %vm464, %v1036, %v1040
        %v1044 = vsel %vm464, %v1038, %v1042
        %v1045 = vsel %vm464, %v1040, %v1036
        %v1046 = vsel %vm464, %v1042, %v1038
        %v1047 = vmul.f32 %v1045, %v472
        %v1048 = vmul.f32 %v1043, %v473
        %v1049 = vmul.f32 %v1046, %v472
        %v1050 = vmul.f32 %v1044, %v473
        %1051 = vset.pattern.permute.xlu0 6
        %1052 = vperm.xlu0 %1051, %v780
        %v1053 = vpop.permute.xlu0 %1052
        %1055 = vset.pattern.permute.xlu0 6
        %1056 = vperm.xlu0 %1055, %v781
        %v1057 = vpop.permute.xlu0 %1056
        %v1059 = vmul.f32 %v1047, %v1053
        %v1060 = vmul.f32 %v1048, %v1053
        %v1061 = vmul.f32 %v1049, %v1057
        %v1062 = vmul.f32 %v1050, %v1057
        %v1063 = vadd.f32 %v1031, %v1059
        %v1064 = vadd.f32 %v1032, %v1060
        %v1065 = vadd.f32 %v1033, %v1061
        %v1066 = vadd.f32 %v1034, %v1062
        %1067 = vrot.lane.b32.xlu0 %v420, 16
        %v1068 = vpop.permute.xlu0 %1067
        %1069 = vrot.lane.b32.xlu0 %v422, 16
        %v1070 = vpop.permute.xlu0 %1069
        %1071 = vrot.lane.b32.xlu0 %v434, 16
        %v1072 = vpop.permute.xlu0 %1071
        %1073 = vrot.lane.b32.xlu0 %v436, 16
        %v1074 = vpop.permute.xlu0 %1073
        %v1075 = vsel %vm504, %v1068, %v1072
        %v1076 = vsel %vm504, %v1070, %v1074
        %v1077 = vsel %vm504, %v1072, %v1068
        %v1078 = vsel %vm504, %v1074, %v1070
        %v1079 = vmul.f32 %v1077, %v512
        %v1080 = vmul.f32 %v1075, %v513
        %v1081 = vmul.f32 %v1078, %v512
        %v1082 = vmul.f32 %v1076, %v513
        %1083 = vset.pattern.permute.xlu0 7
        %1084 = vperm.xlu0 %1083, %v780
        %v1085 = vpop.permute.xlu0 %1084
        %1087 = vset.pattern.permute.xlu0 7
        %1088 = vperm.xlu0 %1087, %v781
        %v1089 = vpop.permute.xlu0 %1088
        %v1091 = vmul.f32 %v1079, %v1085
        %v1092 = vmul.f32 %v1080, %v1085
        %v1093 = vmul.f32 %v1081, %v1089
        %v1094 = vmul.f32 %v1082, %v1089
        %v1095 = vadd.f32 %v1063, %v1091
        %v1096 = vadd.f32 %v1064, %v1092
        %v1097 = vadd.f32 %v1065, %v1093
        %v1098 = vadd.f32 %v1066, %v1094
        %1099 = vrot.lane.b32.xlu0 %v420, 15
        %v1100 = vpop.permute.xlu0 %1099
        %1101 = vrot.lane.b32.xlu0 %v422, 15
        %v1102 = vpop.permute.xlu0 %1101
        %1103 = vrot.lane.b32.xlu0 %v434, 15
        %v1104 = vpop.permute.xlu0 %1103
        %1105 = vrot.lane.b32.xlu0 %v436, 15
        %v1106 = vpop.permute.xlu0 %1105
        %v1107 = vsel %vm544, %v1100, %v1104
        %v1108 = vsel %vm544, %v1102, %v1106
        %v1109 = vsel %vm544, %v1104, %v1100
        %v1110 = vsel %vm544, %v1106, %v1102
        %v1111 = vmul.f32 %v1109, %v552
        %v1112 = vmul.f32 %v1107, %v553
        %v1113 = vmul.f32 %v1110, %v552
        %v1114 = vmul.f32 %v1108, %v553
        %1115 = vset.pattern.permute.xlu0 8
        %1116 = vperm.xlu0 %1115, %v780
        %v1117 = vpop.permute.xlu0 %1116
        %1119 = vset.pattern.permute.xlu0 8
        %1120 = vperm.xlu0 %1119, %v781
        %v1121 = vpop.permute.xlu0 %1120
        %v1123 = vmul.f32 %v1111, %v1117
        %v1124 = vmul.f32 %v1112, %v1117
        %v1125 = vmul.f32 %v1113, %v1121
        %v1126 = vmul.f32 %v1114, %v1121
        %v1127 = vadd.f32 %v1095, %v1123
        %v1128 = vadd.f32 %v1096, %v1124
        %v1129 = vadd.f32 %v1097, %v1125
        %v1130 = vadd.f32 %v1098, %v1126
        %1131 = vrot.lane.b32.xlu0 %v420, 14
        %v1132 = vpop.permute.xlu0 %1131
        %1133 = vrot.lane.b32.xlu0 %v422, 14
        %v1134 = vpop.permute.xlu0 %1133
        %1135 = vrot.lane.b32.xlu0 %v434, 14
        %v1136 = vpop.permute.xlu0 %1135
        %1137 = vrot.lane.b32.xlu0 %v436, 14
        %v1138 = vpop.permute.xlu0 %1137
        %vm1139 = vcmp.lt.s32.totalorder %v463, 14
        %v1140 = vsel %vm1139, %v1132, %v1136
        %v1141 = vsel %vm1139, %v1134, %v1138
        %v1142 = vsel %vm1139, %v1136, %v1132
        %v1143 = vsel %vm1139, %v1138, %v1134
        %s1144 = scalar_lea.vmem %s5, 17
        %v1145 = vld [vmem:[%s1144] ss:$8 sm:$0x3]
        %v1147 = vperm.slane %v1145, 0
        %v1148 = vperm.slane %v1145, 1
        %v1151 = vmul.f32 %v1142, %v1147
        %v1152 = vmul.f32 %v1140, %v1148
        %v1153 = vmul.f32 %v1143, %v1147
        %v1154 = vmul.f32 %v1141, %v1148
        %1155 = vset.pattern.permute.xlu0 9
        %1156 = vperm.xlu0 %1155, %v780
        %v1157 = vpop.permute.xlu0 %1156
        %1159 = vset.pattern.permute.xlu0 9
        %1160 = vperm.xlu0 %1159, %v781
        %v1161 = vpop.permute.xlu0 %1160
        %v1163 = vmul.f32 %v1151, %v1157
        %v1164 = vmul.f32 %v1152, %v1157
        %v1165 = vmul.f32 %v1153, %v1161
        %v1166 = vmul.f32 %v1154, %v1161
        %v1167 = vadd.f32 %v1127, %v1163
        %v1168 = vadd.f32 %v1128, %v1164
        %v1169 = vadd.f32 %v1129, %v1165
        %v1170 = vadd.f32 %v1130, %v1166
        %1171 = vrot.lane.b32.xlu0 %v420, 2
        %v1172 = vpop.permute.xlu0 %1171
        %1173 = vrot.lane.b32.xlu0 %v422, 2
        %v1174 = vpop.permute.xlu0 %1173
        %1175 = vrot.lane.b32.xlu0 %v434, 2
        %v1176 = vpop.permute.xlu0 %1175
        %1177 = vrot.lane.b32.xlu0 %v436, 2
        %v1178 = vpop.permute.xlu0 %1177
        %vm1179 = vcmp.lt.s32.totalorder %v463, 2
        %v1180 = vsel %vm1179, %v1172, %v1176
        %v1181 = vsel %vm1179, %v1174, %v1178
        %v1182 = vsel %vm1179, %v1176, %v1172
        %v1183 = vsel %vm1179, %v1178, %v1174
        %s1184 = scalar_lea.vmem %s5, 18
        %v1185 = vld [vmem:[%s1184] ss:$8 sm:$0x3]
        %v1187 = vperm.slane %v1185, 0
        %v1188 = vperm.slane %v1185, 1
        %v1191 = vmul.f32 %v1182, %v1187
        %v1192 = vmul.f32 %v1180, %v1188
        %v1193 = vmul.f32 %v1183, %v1187
        %v1194 = vmul.f32 %v1181, %v1188
        %1195 = vset.pattern.permute.xlu0 10
        %1196 = vperm.xlu0 %1195, %v780
        %v1197 = vpop.permute.xlu0 %1196
        %1199 = vset.pattern.permute.xlu0 10
        %1200 = vperm.xlu0 %1199, %v781
        %v1201 = vpop.permute.xlu0 %1200
        %v1203 = vmul.f32 %v1191, %v1197
        %v1204 = vmul.f32 %v1192, %v1197
        %v1205 = vmul.f32 %v1193, %v1201
        %v1206 = vmul.f32 %v1194, %v1201
        %v1207 = vadd.f32 %v1167, %v1203
        %v1208 = vadd.f32 %v1168, %v1204
        %v1209 = vadd.f32 %v1169, %v1205
        %v1210 = vadd.f32 %v1170, %v1206
        %1211 = vrot.lane.b32.xlu0 %v420, 1
        %v1212 = vpop.permute.xlu0 %1211
        %1213 = vrot.lane.b32.xlu0 %v422, 1
        %v1214 = vpop.permute.xlu0 %1213
        %1215 = vrot.lane.b32.xlu0 %v434, 1
        %v1216 = vpop.permute.xlu0 %1215
        %1217 = vrot.lane.b32.xlu0 %v436, 1
        %v1218 = vpop.permute.xlu0 %1217
        %v1219 = vsel %vm584, %v1212, %v1216
        %v1220 = vsel %vm584, %v1214, %v1218
        %v1221 = vsel %vm584, %v1216, %v1212
        %v1222 = vsel %vm584, %v1218, %v1214
        %v1223 = vmul.f32 %v1221, %v592
        %v1224 = vmul.f32 %v1219, %v593
        %v1225 = vmul.f32 %v1222, %v592
        %v1226 = vmul.f32 %v1220, %v593
        %1227 = vset.pattern.permute.xlu0 11
        %1228 = vperm.xlu0 %1227, %v780
        %v1229 = vpop.permute.xlu0 %1228
        %1231 = vset.pattern.permute.xlu0 11
        %1232 = vperm.xlu0 %1231, %v781
        %v1233 = vpop.permute.xlu0 %1232
        %v1235 = vmul.f32 %v1223, %v1229
        %v1236 = vmul.f32 %v1224, %v1229
        %v1237 = vmul.f32 %v1225, %v1233
        %v1238 = vmul.f32 %v1226, %v1233
        %v1239 = vadd.f32 %v1207, %v1235
        %v1240 = vadd.f32 %v1208, %v1236
        %v1241 = vadd.f32 %v1209, %v1237
        %v1242 = vadd.f32 %v1210, %v1238
        %1243 = vrot.lane.b32.xlu0 %v420, 127
        %v1244 = vpop.permute.xlu0 %1243
        %1245 = vrot.lane.b32.xlu0 %v422, 127
        %v1246 = vpop.permute.xlu0 %1245
        %1247 = vrot.lane.b32.xlu0 %v434, 127
        %v1248 = vpop.permute.xlu0 %1247
        %1249 = vrot.lane.b32.xlu0 %v436, 127
        %v1250 = vpop.permute.xlu0 %1249
        %v1251 = vsel %vm624, %v1244, %v1248
        %v1252 = vsel %vm624, %v1246, %v1250
        %v1253 = vsel %vm624, %v1248, %v1244
        %v1254 = vsel %vm624, %v1250, %v1246
        %v1255 = vmul.f32 %v1251, %v632
        %v1256 = vmul.f32 %v1253, %v633
        %v1257 = vmul.f32 %v1252, %v632
        %v1258 = vmul.f32 %v1254, %v633
        %1259 = vset.pattern.permute.xlu0 13
        %1260 = vperm.xlu0 %1259, %v780
        %v1261 = vpop.permute.xlu0 %1260
        %1263 = vset.pattern.permute.xlu0 13
        %1264 = vperm.xlu0 %1263, %v781
        %v1265 = vpop.permute.xlu0 %1264
        %v1267 = vmul.f32 %v1255, %v1261
        %v1268 = vmul.f32 %v1256, %v1261
        %v1269 = vmul.f32 %v1257, %v1265
        %v1270 = vmul.f32 %v1258, %v1265
        %v1271 = vadd.f32 %v1239, %v1267
        %v1272 = vadd.f32 %v1240, %v1268
        %v1273 = vadd.f32 %v1241, %v1269
        %v1274 = vadd.f32 %v1242, %v1270
        %1275 = vrot.lane.b32.xlu0 %v420, 126
        %v1276 = vpop.permute.xlu0 %1275
        %1277 = vrot.lane.b32.xlu0 %v422, 126
        %v1278 = vpop.permute.xlu0 %1277
        %1279 = vrot.lane.b32.xlu0 %v434, 126
        %v1280 = vpop.permute.xlu0 %1279
        %1281 = vrot.lane.b32.xlu0 %v436, 126
        %v1282 = vpop.permute.xlu0 %1281
        %vm1283 = vcmp.lt.s32.totalorder %v463, 126
        %v1284 = vsel %vm1283, %v1276, %v1280
        %v1285 = vsel %vm1283, %v1278, %v1282
        %v1286 = vsel %vm1283, %v1280, %v1276
        %v1287 = vsel %vm1283, %v1282, %v1278
        %s1288 = scalar_lea.vmem %s5, 22
        %v1289 = vld [vmem:[%s1288] ss:$8 sm:$0x3]
        %v1291 = vperm.slane %v1289, 0
        %v1292 = vperm.slane %v1289, 1
        %v1295 = vmul.f32 %v1284, %v1291
        %v1296 = vmul.f32 %v1286, %v1292
        %v1297 = vmul.f32 %v1285, %v1291
        %v1298 = vmul.f32 %v1287, %v1292
        %1299 = vset.pattern.permute.xlu0 14
        %1300 = vperm.xlu0 %1299, %v780
        %v1301 = vpop.permute.xlu0 %1300
        %1303 = vset.pattern.permute.xlu0 14
        %1304 = vperm.xlu0 %1303, %v781
        %v1305 = vpop.permute.xlu0 %1304
        %v1307 = vmul.f32 %v1295, %v1301
        %v1308 = vmul.f32 %v1296, %v1301
        %v1309 = vmul.f32 %v1297, %v1305
        %v1310 = vmul.f32 %v1298, %v1305
        %v1311 = vadd.f32 %v1271, %v1307
        %v1312 = vadd.f32 %v1272, %v1308
        %v1313 = vadd.f32 %v1273, %v1309
        %v1314 = vadd.f32 %v1274, %v1310
        %1315 = vrot.lane.b32.xlu0 %v420, 114
        %v1316 = vpop.permute.xlu0 %1315
        %1317 = vrot.lane.b32.xlu0 %v422, 114
        %v1318 = vpop.permute.xlu0 %1317
        %1319 = vrot.lane.b32.xlu0 %v434, 114
        %v1320 = vpop.permute.xlu0 %1319
        %1321 = vrot.lane.b32.xlu0 %v436, 114
        %v1322 = vpop.permute.xlu0 %1321
        %vm1323 = vcmp.lt.s32.totalorder %v463, 114
        %v1324 = vsel %vm1323, %v1316, %v1320
        %v1325 = vsel %vm1323, %v1318, %v1322
        %v1326 = vsel %vm1323, %v1320, %v1316
        %v1327 = vsel %vm1323, %v1322, %v1318
        %s1328 = scalar_lea.vmem %s5, 23
        %v1329 = vld [vmem:[%s1328] ss:$8 sm:$0x3]
        %v1331 = vperm.slane %v1329, 0
        %v1332 = vperm.slane %v1329, 1
        %v1335 = vmul.f32 %v1324, %v1331
        %v1336 = vmul.f32 %v1326, %v1332
        %v1337 = vmul.f32 %v1325, %v1331
        %v1338 = vmul.f32 %v1327, %v1332
        %1339 = vset.pattern.permute.xlu0 15
        %1340 = vperm.xlu0 %1339, %v780
        %v1341 = vpop.permute.xlu0 %1340
        %1343 = vset.pattern.permute.xlu0 15
        %1344 = vperm.xlu0 %1343, %v781
        %v1345 = vpop.permute.xlu0 %1344
        %v1347 = vmul.f32 %v1335, %v1341
        %v1348 = vmul.f32 %v1336, %v1341
        %v1349 = vmul.f32 %v1337, %v1345
        %v1350 = vmul.f32 %v1338, %v1345
        %v1351 = vadd.f32 %v1311, %v1347
        %v1352 = vadd.f32 %v1312, %v1348
        %v1353 = vadd.f32 %v1313, %v1349
        %v1354 = vadd.f32 %v1314, %v1350
        %1355 = vrot.lane.b32.xlu0 %v420, 113
        %v1356 = vpop.permute.xlu0 %1355
        %1357 = vrot.lane.b32.xlu0 %v422, 113
        %v1358 = vpop.permute.xlu0 %1357
        %1359 = vrot.lane.b32.xlu0 %v434, 113
        %v1360 = vpop.permute.xlu0 %1359
        %1361 = vrot.lane.b32.xlu0 %v436, 113
        %v1362 = vpop.permute.xlu0 %1361
        %v1363 = vsel %vm664, %v1356, %v1360
        %v1364 = vsel %vm664, %v1358, %v1362
        %v1365 = vsel %vm664, %v1360, %v1356
        %v1366 = vsel %vm664, %v1362, %v1358
        %v1367 = vmul.f32 %v1363, %v672
        %v1368 = vmul.f32 %v1365, %v673
        %v1369 = vmul.f32 %v1364, %v672
        %v1370 = vmul.f32 %v1366, %v673
        %1371 = vset.pattern.permute.xlu0 16
        %1372 = vperm.xlu0 %1371, %v780
        %v1373 = vpop.permute.xlu0 %1372
        %1375 = vset.pattern.permute.xlu0 16
        %1376 = vperm.xlu0 %1375, %v781
        %v1377 = vpop.permute.xlu0 %1376
        %v1379 = vmul.f32 %v1367, %v1373
        %v1380 = vmul.f32 %v1368, %v1373
        %v1381 = vmul.f32 %v1369, %v1377
        %v1382 = vmul.f32 %v1370, %v1377
        %v1383 = vadd.f32 %v1351, %v1379
        %v1384 = vadd.f32 %v1352, %v1380
        %v1385 = vadd.f32 %v1353, %v1381
        %v1386 = vadd.f32 %v1354, %v1382
        %1387 = vrot.lane.b32.xlu0 %v420, 112
        %v1388 = vpop.permute.xlu0 %1387
        %1389 = vrot.lane.b32.xlu0 %v422, 112
        %v1390 = vpop.permute.xlu0 %1389
        %1391 = vrot.lane.b32.xlu0 %v434, 112
        %v1392 = vpop.permute.xlu0 %1391
        %1393 = vrot.lane.b32.xlu0 %v436, 112
        %v1394 = vpop.permute.xlu0 %1393
        %v1395 = vsel %vm704, %v1388, %v1392
        %v1396 = vsel %vm704, %v1390, %v1394
        %v1397 = vsel %vm704, %v1392, %v1388
        %v1398 = vsel %vm704, %v1394, %v1390
        %v1399 = vmul.f32 %v1395, %v712
        %v1400 = vmul.f32 %v1397, %v713
        %v1401 = vmul.f32 %v1396, %v712
        %v1402 = vmul.f32 %v1398, %v713
        %1403 = vset.pattern.permute.xlu0 17
        %1404 = vperm.xlu0 %1403, %v780
        %v1405 = vpop.permute.xlu0 %1404
        %1407 = vset.pattern.permute.xlu0 17
        %1408 = vperm.xlu0 %1407, %v781
        %v1409 = vpop.permute.xlu0 %1408
        %v1411 = vmul.f32 %v1399, %v1405
        %v1412 = vmul.f32 %v1400, %v1405
        %v1413 = vmul.f32 %v1401, %v1409
        %v1414 = vmul.f32 %v1402, %v1409
        %v1415 = vadd.f32 %v1383, %v1411
        %v1416 = vadd.f32 %v1384, %v1412
        %v1417 = vadd.f32 %v1385, %v1413
        %v1418 = vadd.f32 %v1386, %v1414
        %1419 = vrot.lane.b32.xlu0 %v420, 111
        %v1420 = vpop.permute.xlu0 %1419
        %1421 = vrot.lane.b32.xlu0 %v422, 111
        %v1422 = vpop.permute.xlu0 %1421
        %1423 = vrot.lane.b32.xlu0 %v434, 111
        %v1424 = vpop.permute.xlu0 %1423
        %1425 = vrot.lane.b32.xlu0 %v436, 111
        %v1426 = vpop.permute.xlu0 %1425
        %v1427 = vsel %vm744, %v1420, %v1424
        %v1428 = vsel %vm744, %v1422, %v1426
        %v1429 = vsel %vm744, %v1424, %v1420
        %v1430 = vsel %vm744, %v1426, %v1422
        %v1431 = vmul.f32 %v1427, %v752
        %v1432 = vmul.f32 %v1429, %v753
        %v1433 = vmul.f32 %v1428, %v752
        %v1434 = vmul.f32 %v1430, %v753
        %1435 = vset.pattern.permute.xlu0 18
        %1436 = vperm.xlu0 %1435, %v780
        %v1437 = vpop.permute.xlu0 %1436
        %1439 = vset.pattern.permute.xlu0 18
        %1440 = vperm.xlu0 %1439, %v781
        %v1441 = vpop.permute.xlu0 %1440
        %v1443 = vmul.f32 %v1431, %v1437
        %v1444 = vmul.f32 %v1432, %v1437
        %v1445 = vmul.f32 %v1433, %v1441
        %v1446 = vmul.f32 %v1434, %v1441
        %v1447 = vadd.f32 %v1415, %v1443
        %v1448 = vadd.f32 %v1416, %v1444
        %v1449 = vadd.f32 %v1417, %v1445
        %v1450 = vadd.f32 %v1418, %v1446
        %1451 = vrot.lane.b32.xlu0 %v420, 110
        %v1452 = vpop.permute.xlu0 %1451
        %1453 = vrot.lane.b32.xlu0 %v422, 110
        %v1454 = vpop.permute.xlu0 %1453
        %1455 = vrot.lane.b32.xlu0 %v434, 110
        %v1456 = vpop.permute.xlu0 %1455
        %1457 = vrot.lane.b32.xlu0 %v436, 110
        %v1458 = vpop.permute.xlu0 %1457
        %vm1459 = vcmp.lt.s32.totalorder %v463, 110
        %v1460 = vsel %vm1459, %v1452, %v1456
        %v1461 = vsel %vm1459, %v1454, %v1458
        %v1462 = vsel %vm1459, %v1456, %v1452
        %v1463 = vsel %vm1459, %v1458, %v1454
        %s1464 = scalar_lea.vmem %s5, 35
        %v1465 = vld [vmem:[%s1464] ss:$8 sm:$0x3]
        %v1467 = vperm.slane %v1465, 0
        %v1468 = vperm.slane %v1465, 1
        %v1471 = vmul.f32 %v1460, %v1467
        %v1472 = vmul.f32 %v1462, %v1468
        %v1473 = vmul.f32 %v1461, %v1467
        %v1474 = vmul.f32 %v1463, %v1468
        %1475 = vset.pattern.permute.xlu0 19
        %1476 = vperm.xlu0 %1475, %v780
        %v1477 = vpop.permute.xlu0 %1476
        %1479 = vset.pattern.permute.xlu0 19
        %1480 = vperm.xlu0 %1479, %v781
        %v1481 = vpop.permute.xlu0 %1480
        %v1483 = vmul.f32 %v1471, %v1477
        %v1484 = vmul.f32 %v1472, %v1477
        %v1485 = vmul.f32 %v1473, %v1481
        %v1486 = vmul.f32 %v1474, %v1481
        %v1487 = vadd.f32 %v1447, %v1483
        %v1488 = vadd.f32 %v1448, %v1484
        %v1489 = vadd.f32 %v1449, %v1485
        %v1490 = vadd.f32 %v1450, %v1486
        %1491 = vrot.lane.b32.xlu0 %v420, 98
        %v1492 = vpop.permute.xlu0 %1491
        %1493 = vrot.lane.b32.xlu0 %v422, 98
        %v1494 = vpop.permute.xlu0 %1493
        %1495 = vrot.lane.b32.xlu0 %v434, 98
        %v1496 = vpop.permute.xlu0 %1495
        %1497 = vrot.lane.b32.xlu0 %v436, 98
        %v1498 = vpop.permute.xlu0 %1497
        %vm1499 = vcmp.lt.s32.totalorder %v463, 98
        %v1500 = vsel %vm1499, %v1492, %v1496
        %v1501 = vsel %vm1499, %v1494, %v1498
        %v1502 = vsel %vm1499, %v1496, %v1492
        %v1503 = vsel %vm1499, %v1498, %v1494
        %s1504 = scalar_lea.vmem %s5, 36
        %v1505 = vld [vmem:[%s1504] ss:$8 sm:$0x3]
        %v1507 = vperm.slane %v1505, 0
        %v1508 = vperm.slane %v1505, 1
        %v1511 = vmul.f32 %v1500, %v1507
        %v1512 = vmul.f32 %v1502, %v1508
        %v1513 = vmul.f32 %v1501, %v1507
        %v1514 = vmul.f32 %v1503, %v1508
        %1515 = vset.pattern.permute.xlu0 20
        %1516 = vperm.xlu0 %1515, %v780
        %v1517 = vpop.permute.xlu0 %1516
        %1519 = vset.pattern.permute.xlu0 20
        %1520 = vperm.xlu0 %1519, %v781
        %v1521 = vpop.permute.xlu0 %1520
        %v1523 = vmul.f32 %v1511, %v1517
        %v1524 = vmul.f32 %v1512, %v1517
        %v1525 = vmul.f32 %v1513, %v1521
        %v1526 = vmul.f32 %v1514, %v1521
        %v1527 = vadd.f32 %v1487, %v1523
        %v1528 = vadd.f32 %v1488, %v1524
        %v1529 = vadd.f32 %v1489, %v1525
        %v1530 = vadd.f32 %v1490, %v1526
        %1531 = vrot.lane.b32.xlu0 %v420, 97
        %v1532 = vpop.permute.xlu0 %1531
        %1533 = vrot.lane.b32.xlu0 %v422, 97
        %v1534 = vpop.permute.xlu0 %1533
        %1535 = vrot.lane.b32.xlu0 %v434, 97
        %v1536 = vpop.permute.xlu0 %1535
        %1537 = vrot.lane.b32.xlu0 %v436, 97
        %v1538 = vpop.permute.xlu0 %1537
        %vm1539 = vcmp.lt.s32.totalorder %v463, 97
        %v1540 = vsel %vm1539, %v1532, %v1536
        %v1541 = vsel %vm1539, %v1534, %v1538
        %v1542 = vsel %vm1539, %v1536, %v1532
        %v1543 = vsel %vm1539, %v1538, %v1534
        %s1544 = scalar_lea.vmem %s5, 37
        %v1545 = vld [vmem:[%s1544] ss:$8 sm:$0x3]
        %v1547 = vperm.slane %v1545, 0
        %v1548 = vperm.slane %v1545, 1
        %v1551 = vmul.f32 %v1540, %v1547
        %v1552 = vmul.f32 %v1542, %v1548
        %v1553 = vmul.f32 %v1541, %v1547
        %v1554 = vmul.f32 %v1543, %v1548
        %1555 = vset.pattern.permute.xlu0 21
        %1556 = vperm.xlu0 %1555, %v780
        %v1557 = vpop.permute.xlu0 %1556
        %1559 = vset.pattern.permute.xlu0 21
        %1560 = vperm.xlu0 %1559, %v781
        %v1561 = vpop.permute.xlu0 %1560
        %v1563 = vmul.f32 %v1551, %v1557
        %v1564 = vmul.f32 %v1552, %v1557
        %v1565 = vmul.f32 %v1553, %v1561
        %v1566 = vmul.f32 %v1554, %v1561
        %v1567 = vadd.f32 %v1527, %v1563
        %v1568 = vadd.f32 %v1528, %v1564
        %v1569 = vadd.f32 %v1529, %v1565
        %v1570 = vadd.f32 %v1530, %v1566
        %1571 = vrot.lane.b32.xlu0 %v420, 96
        %v1572 = vpop.permute.xlu0 %1571
        %1573 = vrot.lane.b32.xlu0 %v422, 96
        %v1574 = vpop.permute.xlu0 %1573
        %1575 = vrot.lane.b32.xlu0 %v434, 96
        %v1576 = vpop.permute.xlu0 %1575
        %1577 = vrot.lane.b32.xlu0 %v436, 96
        %v1578 = vpop.permute.xlu0 %1577
        %vm1579 = vcmp.lt.s32.totalorder %v463, 96
        %v1580 = vsel %vm1579, %v1572, %v1576
        %v1581 = vsel %vm1579, %v1574, %v1578
        %v1582 = vsel %vm1579, %v1576, %v1572
        %v1583 = vsel %vm1579, %v1578, %v1574
        %s1584 = scalar_lea.vmem %s5, 38
        %v1585 = vld [vmem:[%s1584] ss:$8 sm:$0x3]
        %v1587 = vperm.slane %v1585, 0
        %v1588 = vperm.slane %v1585, 1
        %v1591 = vmul.f32 %v1580, %v1587
        %v1592 = vmul.f32 %v1582, %v1588
        %v1593 = vmul.f32 %v1581, %v1587
        %v1594 = vmul.f32 %v1583, %v1588
        %1595 = vset.pattern.permute.xlu0 22
        %1596 = vperm.xlu0 %1595, %v780
        %v1597 = vpop.permute.xlu0 %1596
        %1599 = vset.pattern.permute.xlu0 22
        %1600 = vperm.xlu0 %1599, %v781
        %v1601 = vpop.permute.xlu0 %1600
        %v1603 = vmul.f32 %v1591, %v1597
        %v1604 = vmul.f32 %v1592, %v1597
        %v1605 = vmul.f32 %v1593, %v1601
        %v1606 = vmul.f32 %v1594, %v1601
        %v1607 = vadd.f32 %v1567, %v1603
        %v1608 = vadd.f32 %v1568, %v1604
        %v1609 = vadd.f32 %v1569, %v1605
        %v1610 = vadd.f32 %v1570, %v1606
        %1611 = vrot.lane.b32.xlu0 %v420, 95
        %v1612 = vpop.permute.xlu0 %1611
        %1613 = vrot.lane.b32.xlu0 %v422, 95
        %v1614 = vpop.permute.xlu0 %1613
        %1615 = vrot.lane.b32.xlu0 %v434, 95
        %v1616 = vpop.permute.xlu0 %1615
        %1617 = vrot.lane.b32.xlu0 %v436, 95
        %v1618 = vpop.permute.xlu0 %1617
        %vm1619 = vcmp.lt.s32.totalorder %v463, 95
        %v1620 = vsel %vm1619, %v1612, %v1616
        %v1621 = vsel %vm1619, %v1614, %v1618
        %v1622 = vsel %vm1619, %v1616, %v1612
        %v1623 = vsel %vm1619, %v1618, %v1614
        %s1624 = scalar_lea.vmem %s5, 39
        %v1625 = vld [vmem:[%s1624] ss:$8 sm:$0x3]
        %v1627 = vperm.slane %v1625, 0
        %v1628 = vperm.slane %v1625, 1
        %v1631 = vmul.f32 %v1620, %v1627
        %v1632 = vmul.f32 %v1622, %v1628
        %v1633 = vmul.f32 %v1621, %v1627
        %v1634 = vmul.f32 %v1623, %v1628
        %1635 = vset.pattern.permute.xlu0 23
        %1636 = vperm.xlu0 %1635, %v780
        %v1637 = vpop.permute.xlu0 %1636
        %1639 = vset.pattern.permute.xlu0 23
        %1640 = vperm.xlu0 %1639, %v781
        %v1641 = vpop.permute.xlu0 %1640
        %v1643 = vmul.f32 %v1631, %v1637
        %v1644 = vmul.f32 %v1632, %v1637
        %v1645 = vmul.f32 %v1633, %v1641
        %v1646 = vmul.f32 %v1634, %v1641
        %v1647 = vadd.f32 %v1607, %v1643
        %v1648 = vadd.f32 %v1608, %v1644
        %v1649 = vadd.f32 %v1609, %v1645
        %v1650 = vadd.f32 %v1610, %v1646
        %1651 = vrot.lane.b32.xlu0 %v420, 94
        %v1652 = vpop.permute.xlu0 %1651
        %1653 = vrot.lane.b32.xlu0 %v422, 94
        %v1654 = vpop.permute.xlu0 %1653
        %1655 = vrot.lane.b32.xlu0 %v434, 94
        %v1656 = vpop.permute.xlu0 %1655
        %1657 = vrot.lane.b32.xlu0 %v436, 94
        %v1658 = vpop.permute.xlu0 %1657
        %vm1659 = vcmp.lt.s32.totalorder %v463, 94
        %v1660 = vsel %vm1659, %v1652, %v1656
        %v1661 = vsel %vm1659, %v1654, %v1658
        %v1662 = vsel %vm1659, %v1656, %v1652
        %v1663 = vsel %vm1659, %v1658, %v1654
        %s1664 = scalar_lea.vmem %s5, 48
        %v1665 = vld [vmem:[%s1664] ss:$8 sm:$0x3]
        %v1667 = vperm.slane %v1665, 0
        %v1668 = vperm.slane %v1665, 1
        %v1671 = vmul.f32 %v1660, %v1667
        %v1672 = vmul.f32 %v1662, %v1668
        %v1673 = vmul.f32 %v1661, %v1667
        %v1674 = vmul.f32 %v1663, %v1668
        %1675 = vset.pattern.permute.xlu0 24
        %1676 = vperm.xlu0 %1675, %v780
        %v1677 = vpop.permute.xlu0 %1676
        %1679 = vset.pattern.permute.xlu0 24
        %1680 = vperm.xlu0 %1679, %v781
        %v1681 = vpop.permute.xlu0 %1680
        %v1683 = vmul.f32 %v1671, %v1677
        %v1684 = vmul.f32 %v1672, %v1677
        %v1685 = vmul.f32 %v1673, %v1681
        %v1686 = vmul.f32 %v1674, %v1681
        %v1687 = vadd.f32 %v1647, %v1683
        %v1688 = vadd.f32 %v1648, %v1684
        %v1689 = vadd.f32 %v1649, %v1685
        %v1690 = vadd.f32 %v1650, %v1686
        %v1691 = vmax.f32 %v1687, 0.0
        %v1692 = vmax.f32 %v1688, 0.0
        %v1693 = vmax.f32 %v1689, 0.0
        %v1694 = vmax.f32 %v1690, 0.0
        %v1695 = vld [vmem:[%s6] sm:$0xf]
        %v1696 = vpack.c.bf16 %v778, %v776
        %v1697 = vpack.c.bf16 %v779, %v777
        %v1698 = vld [vmem:[%s7] sm:$0xf]
        %v1699 = vpack.c.bf16 %v1693, %v1691
        %v1700 = vpack.c.bf16 %v1694, %v1692
        %vm1701 = vcmask 130048
        %v1703 = vsel %vm1701, %v1698, 0
        %1705 = vmatpush.bf16.msra.mxu0 0
        %1706 = vmatpush.bf16.msra.mxu0 0
        %1707 = vmatpush.bf16.msra.mxu0 0
        %1708 = vmatpush.bf16.msra.mxu0 0
        %1709 = vmatpush.bf16.msra.mxu0 0
        %1710 = vmatpush.bf16.msra.mxu0 0
        %1711 = vmatpush.bf16.msra.mxu0 0
        %1712 = vmatpush.bf16.msra.mxu0 %v1699
        %1713 = vmatmul.bf16.gmra.mxu0 %v1703
        %v1714 = vpop.f32.mrf.mxu0
        %v1715 = vadd.f32 0.0, %v1714
        %v1716 = vpop.f32.mrf.mxu0
        %1717 = vdwg.mxu0
        %1718 = vmatpush.bf16.msra.mxu0 0
        %1719 = vmatpush.bf16.msra.mxu0 0
        %1720 = vmatpush.bf16.msra.mxu0 0
        %1721 = vmatpush.bf16.msra.mxu0 0
        %1722 = vmatpush.bf16.msra.mxu0 0
        %1723 = vmatpush.bf16.msra.mxu0 0
        %1724 = vmatpush.bf16.msra.mxu0 0
        %1725 = vmatpush.bf16.msra.mxu0 %v1700
        %1726 = vmatmul.bf16.gmra.mxu0 %v1703
        %v1727 = vpop.f32.mrf.mxu0
        %v1728 = vadd.f32 0.0, %v1727
        %v1729 = vpop.f32.mrf.mxu0
        %1730 = vdwg.mxu0
        %v1732 = vsel %vm1701, %v1695, 0
        %1734 = vmatpush.bf16.msra.mxu0 0
        %1735 = vmatpush.bf16.msra.mxu0 0
        %1736 = vmatpush.bf16.msra.mxu0 0
        %1737 = vmatpush.bf16.msra.mxu0 0
        %1738 = vmatpush.bf16.msra.mxu0 0
        %1739 = vmatpush.bf16.msra.mxu0 0
        %1740 = vmatpush.bf16.msra.mxu0 0
        %1741 = vmatpush.bf16.msra.mxu0 %v1696
        %1742 = vmatmul.bf16.gmra.mxu0 %v1732
        %v1743 = vpop.f32.mrf.mxu0
        %v1744 = vadd.f32 %v1715, %v1743
        %v1745 = vpop.f32.mrf.mxu0
        %1746 = vdwg.mxu0
        %1747 = vmatpush.bf16.msra.mxu0 0
        %1748 = vmatpush.bf16.msra.mxu0 0
        %1749 = vmatpush.bf16.msra.mxu0 0
        %1750 = vmatpush.bf16.msra.mxu0 0
        %1751 = vmatpush.bf16.msra.mxu0 0
        %1752 = vmatpush.bf16.msra.mxu0 0
        %1753 = vmatpush.bf16.msra.mxu0 0
        %1754 = vmatpush.bf16.msra.mxu0 %v1697
        %1755 = vmatmul.bf16.gmra.mxu0 %v1732
        %v1756 = vpop.f32.mrf.mxu0
        %v1757 = vadd.f32 %v1728, %v1756
        %v1758 = vpop.f32.mrf.mxu0
        %1759 = vdwg.mxu0
        %v1760 = vadd.f32 %v1744, %v1757
        %1761 = vadd.xlane.f32.xlu0 %v1760
        %v1762 = vpop.xlane.xlu0 %1761
        %v1763 = vrcp.pop 256.0
        %v1764 = vmul.f32 256.0, %v1763
        %v1765 = vsub.f32 1.0, %v1764
        %v1766 = vmul.f32 %v1763, %v1765
        %v1767 = vadd.f32 %v1763, %v1766
        %vm1768 = vweird.f32 %v1763
        %v1769 = vsel %vm1768, %v1763, %v1767
        %v1770 = vmul.f32 %v1762, %v1769
        %v1771 = vlaneseq
        %v1772 = vshrl.u32 %v1771, 7
        %vm1773 = vcmp.ge.s32.totalorder %v1772, 1
        %v1774 = vrot.slane %v1770, 7
        %v1775 = vsel %vm1773, %v1774, 0.0
        %vm1776 = vcmp.le.s32.totalorder %v1772, 6
        %v1777 = vrot.slane %v1770, 1
        %v1778 = vsel %vm1776, %v1777, 0.0
        %s1779 = sld [smem:[#allocation2]]
        %v1780 = vstv %s1779
        %v1781 = vmul.f32 %v1780, %v1775
        %s1782 = sld [smem:[#allocation2 + $0x1]]
        %v1783 = vstv %s1782
        %v1784 = vmul.f32 %v1783, %v1770
        %v1785 = vadd.f32 %v1781, %v1784
        %s1786 = sld [smem:[#allocation2 + $0x2]]
        %v1787 = vstv %s1786
        %v1788 = vmul.f32 %v1787, %v1778
        %v1789 = vadd.f32 %v1785, %v1788
        %v1790 = vsub.f32 0.0, %v1789
        %v1791 = vmul.f32 %v1790, 1.442695
        %v1792 = vpow.pop %v1791
        %v1793 = vadd.f32 %v1792, 1.0
        %v1794 = vrcp.pop %v1793
        %v1795 = vmul.f32 %v1793, %v1794
        %v1796 = vsub.f32 1.0, %v1795
        %v1797 = vmul.f32 %v1794, %v1796
        %v1798 = vadd.f32 %v1794, %v1797
        %vm1799 = vweird.f32 %v1793
        %vm1800 = vweird.f32 %v1794
        %vm1801 = vmor %vm1799, %vm1800
        %v1802 = vsel %vm1801, %v1794, %v1798
        %v1803 = vand.u32 2147483647, %v1793
        %vm1804 = vcmp.eq.f32.partialorder %v1803, 8.507059e+37
        %v1805 = vand.u32 %v1793, 2147483648
        %v1806 = vor.u32 1.1754944e-38, %v1805
        %v1807 = vsel %vm1804, %v1806, %v1802
        %v1808 = vmul.f32 1.0, %v1807
        %1810 = vset.pattern.permute.xlu0 0
        %1811 = vperm.xlu0 %1810, %v1808
        %v1812 = vpop.permute.xlu0 %1811
        %v1814 = vmul.f32 %v1744, %v1812
        %v1815 = vmul.f32 %v1757, %v1812
        %1816 = vst [vmem:[%s346] sm:$0xff] %v1814
        %1817 = vst [vmem:[%s346 + $0x8] sm:$0xff] %v1815
        %p1818 = scmp.lt.s32.totalorder %s21, 1
        %s1819 = scalar_select %p1818, %s21, 1
        %s1820 = smul.addr %s1819, 2
        %s1821 = smul.addr %s1820, 8
        %s1822 = scalar_lea.vmem %s9, %s1821
        // Predicated region
        $region61: #{feed_forward.1} parent=55 // pred_check
          %p1823 = pneg %p233
        $region62: #{feed_forward.1} parent=55 // pred_check_branch
          %1825 = sbr.rel (%p1823) target = $region64
        $region63: #{feed_forward.1} parent=55 // pred_region
          _
        $region64: #{feed_forward.1} parent=55 // pred_fallthru
          _
      $region56: #{feed_forward.1} parent=5 // pred_fallthru
        _
      %p1826 = scmp.le.s32.totalorder 2, %s16
      // Predicated region
      $region65: #{feed_forward.1} parent=5 // pred_check
        %p1827 = pneg %p1826
      $region66: #{feed_forward.1} parent=5 // pred_check_branch
        %1829 = sbr.rel (%p1827) target = $region68
      $region67: #{feed_forward.1} parent=5 // pred_region
        %s1830 = ssub.s32 %s16, 2
        // Predicated region
        $region69: #{feed_forward.1} parent=67 // pred_check
          %p1831 = pneg %p239
        $region70: #{feed_forward.1} parent=67 // pred_check_branch
          %1833 = sbr.rel (%p1831) target = $region72
        $region71: #{feed_forward.1} parent=67 // pred_region
          %p1834 = scmp.lt.s32.totalorder %s22, 1
          %s1835 = scalar_select %p1834, %s22, 1
          %s1836 = smul.addr %s1835, 2
          %s1837 = smul.addr %s1836, 8
          %s1838 = scalar_lea.vmem %s9, %s1837
        $region72: #{feed_forward.1} parent=67 // pred_fallthru
          _
      $region68: #{feed_forward.1} parent=5 // pred_fallthru
        _
    $region6: #{feed_forward.1} parent=1 // loop_footer
      %s20 = sadd.s32 1, %s16
    $region7: #{feed_forward.1} parent=1 // loop_footer_branch
      %15 = sbr.rel target = $region3
    $region8: #{feed_forward.1} parent=1 // loop_exit
      _
    %1839 = vsyncpa [#allocation3], 1
    %s1840 = scalar_lea.sflag [#allocation3], 1
    %1841 = vsyncpa %s1840, 1

</llo_original>
